<compile_context>
chip_gen: v7x
topology: tpu7x:2x2x1
jax: 0.10.0
libtpu: 0.0.40
codegen_flags: <defaults>
</compile_context>

<pallas_src>
import functools

import jax
import jax.numpy as jnp
import numpy as np
from jax.experimental import pallas as pl
from jax.experimental.pallas import tpu as pltpu

RANK = 32
HIDDEN = 200
SIZES = (16, 16, 16, 16, 16, 16, 16, 16)   # (s0..s7), all embedding tables = 16 rows
INIT_SIZE = 1e-3


def _vmem_specs(n):
    return [pl.BlockSpec(memory_space=pltpu.MemorySpace.VMEM) for _ in range(n)]


# ------------------------------ fused kernel --------------------------------

def _fused_forward_kernel(
        # inputs
        path1_ref, path2_ref,                         # stacked re/im MLP inputs
        w1_ref, b1_ref, w2_ref, b2_ref, wo_ref, bo_ref,
        a_re_ref, a_im_ref,                           # stacked LHS-a: [score_a; origin; path2_origin]
        sb_re_ref, sb_im_ref,                         # score operand b (tran or inv)
        m_re_ref, m_im_ref,                           # stacked [origin; tran; loc] for the moduli
        u_re_ref, u_im_ref, sm_re_ref, sm_im_ref,     # sim-score operands
        rt_re_ref, rt_im_ref,                         # right  pre-transposed: (rank, N)
        rst_re_ref, rst_im_ref,                       # right_sim pre-transposed: (rank, Ns)
        # outputs
        scores_ref,                                   # (2B+P, N)   rows: [score; score3; score4]
        simsc_ref,                                    # (S, Ns)
        mods_ref,                                     # (3B, rank)  rows: [|origin|; |tran|; |loc|]
        # scratch
        bre_sc, bim_sc,                               # (2B+P, rank) complex-product b operand
        *, B, P):
    f32 = jnp.float32

    # ---- batched re/im MLPs (rows [0:B]=re, [B:2B]=im) ----------------------
    h1 = jnp.maximum(
        jnp.dot(path1_ref[...], w1_ref[...], preferred_element_type=f32) + b1_ref[...],
        0.0)
    rp1 = jnp.dot(h1, wo_ref[...], preferred_element_type=f32) + bo_ref[...]   # (2B, rank)

    h2 = jnp.maximum(
        jnp.dot(path2_ref[...], w2_ref[...], preferred_element_type=f32) + b2_ref[...],
        0.0)
    rp2 = jnp.dot(h2, wo_ref[...], preferred_element_type=f32) + bo_ref[...]   # (2P, rank)

    # ---- assemble the stacked "b" operand of the complex products ----------
    #   rows [0:B]      : tran (or inv)          -> score
    #   rows [B:2B]     : rel_path1 (MLP output) -> score3
    #   rows [2B:2B+P]  : rel_path2 (MLP output) -> score4
    bre_sc[0:B, :] = sb_re_ref[...]
    bim_sc[0:B, :] = sb_im_ref[...]
    bre_sc[B:2 * B, :] = rp1[:B]
    bim_sc[B:2 * B, :] = rp1[B:]
    bre_sc[2 * B:2 * B + P, :] = rp2[:P]
    bim_sc[2 * B:2 * B + P, :] = rp2[P:]

    # ---- shared-right complex scores: one stacked LHS, 2 MXU ops -----------
    a_re = a_re_ref[...]
    a_im = a_im_ref[...]
    b_re = bre_sc[...]
    b_im = bim_sc[...]
    q_re = a_re * b_re - a_im * b_im
    q_im = a_im * b_re + a_re * b_im
    scores_ref[...] = (
        jnp.dot(q_re, rt_re_ref[...], preferred_element_type=f32)
        + jnp.dot(q_im, rt_im_ref[...], preferred_element_type=f32))

    # ---- sim_score ----------------------------------------------------------
    u_re = u_re_ref[...]
    u_im = u_im_ref[...]
    s_re = sm_re_ref[...]
    s_im = sm_im_ref[...]
    qs_re = u_re * s_re - u_im * s_im
    qs_im = u_im * s_re + u_re * s_im
    simsc_ref[...] = (
        jnp.dot(qs_re, rst_re_ref[...], preferred_element_type=f32)
        + jnp.dot(qs_im, rst_im_ref[...], preferred_element_type=f32))

    # ---- moduli (origin / tran / loc stacked, one elementwise store) -------
    m_re = m_re_ref[...]
    m_im = m_im_ref[...]
    mods_ref[...] = jnp.sqrt(m_re * m_re + m_im * m_im)


# ------------------------------ parameters ----------------------------------

def init_params(key):
    # nn.Embedding(s, 2*rank) weights ~ N(0,1) * init_size (all 12 are scaled)
    emb_rows = [SIZES[2], SIZES[6], SIZES[2], SIZES[5], SIZES[3], SIZES[4],
                SIZES[4], SIZES[4], SIZES[1], SIZES[1], SIZES[0], SIZES[7]]
    keys = jax.random.split(key, len(emb_rows) + 6)
    emb = [INIT_SIZE * jax.random.normal(keys[i], (n, 2 * RANK), jnp.float32)
           for i, n in enumerate(emb_rows)]
    k = len(emb_rows)

    def linear(kw, kb, fan_in, fan_out):
        bound = 1.0 / np.sqrt(fan_in)
        w = jax.random.uniform(kw, (fan_in, fan_out), jnp.float32, -bound, bound)
        b = jax.random.uniform(kb, (1, fan_out), jnp.float32, -bound, bound)
        return w, b

    w1, b1 = linear(keys[k + 0], keys[k + 1], 5 * RANK, HIDDEN)   # hidden1
    w2, b2 = linear(keys[k + 2], keys[k + 3], 3 * RANK, HIDDEN)   # hidden2
    wo, bo = linear(keys[k + 4], keys[k + 5], HIDDEN, RANK)       # out
    # TODO(synk): nn.BatchNorm1d(sizes[2]) is declared in __init__ but never
    # used in forward(); omitted.
    return dict(emb=emb, w1=w1, b1=b1, w2=w2, b2=b2, wo=wo, bo=bo)


# --------------------------- shared gather glue ------------------------------

def _prepare(params, x, path2_origin, path2_mid, similar):
    """Embedding gathers + diachronic + concat glue shared by both paths."""
    emb = params["emb"]
    rank = RANK
    sp = lambda a: (a[:, :rank], a[:, rank:])
    g = {}
    g["origin"] = emb[0][x[:, 6]]
    g["tran"] = emb[1][x[:, 8]]
    g["loc"] = emb[2][x[:, 3]]
    g["tim"] = emb[9][x[:, 1]]
    g["inv"] = emb[3][x[:, 5]]
    acc = emb[4][x[:, 2]]
    tim1 = emb[8][x[:, 4]]
    x7 = x[:, 7]
    delta = emb[5][x7] * jnp.sin(
        emb[6][x7] * x7.astype(jnp.float32)[:, None] + emb[7][x7])
    g["right"] = emb[2]

    accs, tim1s, deltas = sp(acc), sp(tim1), sp(delta)
    tims, invs = sp(g["tim"]), sp(g["inv"])
    g["path1_re"] = jnp.concatenate([accs[0], tim1s[0], deltas[0], tims[0], invs[0]], 1)
    g["path1_im"] = jnp.concatenate([accs[1], tim1s[1], deltas[1], tims[1], invs[1]], 1)

    P = path2_origin.shape[0]
    g["p2o"] = emb[0][path2_origin]
    p2m = emb[0][path2_mid]
    p2t = jnp.tile(emb[1][x[0, 8]][None, :], (P, 1))   # x[:,8][0].repeat(P)
    p2ms, p2ts = sp(p2m), sp(p2t)
    g["path2_re"] = jnp.concatenate([p2ts[0], p2ts[0], p2ms[0]], 1)
    g["path2_im"] = jnp.concatenate([p2ts[1], p2ts[1], p2ms[1]], 1)

    user1 = emb[10][similar[:, 0]]
    g["user1"] = user1 / jnp.maximum(jnp.linalg.norm(user1, axis=1, keepdims=True), 1e-12)
    g["sim"] = emb[11][similar[:, 1]]
    g["right_sim"] = emb[10]
    return g


# ------------------------------ Pallas forward -------------------------------

def complex_forward_pallas(params, x, path2_origin, path2_mid, path2_user, similar,
                           test_transition=True):
    # path2_user is unused in the torch forward as well.
    del path2_user
    g = _prepare(params, x, path2_origin, path2_mid, similar)
    rank = RANK
    B = x.shape[0]
    P = path2_origin.shape[0]
    S = similar.shape[0]
    N = g["right"].shape[0]
    Ns = g["right_sim"].shape[0]
    sp = lambda a: (a[:, :rank], a[:, rank:])

    sa, sb = (g["origin"], g["tran"]) if test_transition else (g["tim"], g["inv"])
    sa_re, sa_im = sp(sa)
    sb_re, sb_im = sp(sb)
    org_re, org_im = sp(g["origin"])
    trn_re, trn_im = sp(g["tran"])
    loc_re, loc_im = sp(g["loc"])
    p2o_re, p2o_im = sp(g["p2o"])
    u_re, u_im = sp(g["user1"])
    sm_re, sm_im = sp(g["sim"])
    r_re, r_im = sp(g["right"])
    rs_re, rs_im = sp(g["right_sim"])

    # Row-stack re over im for the batched MLPs, stack the three score LHSs,
    # and stack the modulus inputs. All row offsets are multiples of 8.
    path1 = jnp.concatenate([g["path1_re"], g["path1_im"]], 0)    # (2B, 5*rank)
    path2 = jnp.concatenate([g["path2_re"], g["path2_im"]], 0)    # (2P, 3*rank)
    a_re = jnp.concatenate([sa_re, org_re, p2o_re], 0)            # (2B+P, rank)
    a_im = jnp.concatenate([sa_im, org_im, p2o_im], 0)
    m_re = jnp.concatenate([org_re, trn_re, loc_re], 0)           # (3B, rank)
    m_im = jnp.concatenate([org_im, trn_im, loc_im], 0)

    kernel = functools.partial(_fused_forward_kernel, B=B, P=P)
    scores, sim_score, mods = pl.pallas_call(
        kernel,
        out_shape=(
            jax.ShapeDtypeStruct((2 * B + P, N), jnp.float32),
            jax.ShapeDtypeStruct((S, Ns), jnp.float32),
            jax.ShapeDtypeStruct((3 * B, rank), jnp.float32),
        ),
        in_specs=_vmem_specs(22),
        out_specs=tuple(_vmem_specs(3)),
        scratch_shapes=[pltpu.VMEM((2 * B + P, rank), jnp.float32),
                        pltpu.VMEM((2 * B + P, rank), jnp.float32)],
    )(path1, path2,
      params["w1"], params["b1"], params["w2"], params["b2"],
      params["wo"], params["bo"],
      a_re, a_im, sb_re, sb_im, m_re, m_im,
      u_re, u_im, sm_re, sm_im,
      r_re.T, r_im.T, rs_re.T, rs_im.T)

    score, score3, score4 = scores[:B], scores[B:2 * B], scores[2 * B:]
    mods_out = (mods[:B], mods[B:2 * B], mods[2 * B:])
    # NOTE: eng1/eng2 are computed in the PyTorch forward but never returned
    # (dead code); skipped.
    return score, sim_score, score3, score4, mods_out


# --------------------------- pure-JAX reference ------------------------------

def complex_forward_ref(params, x, path2_origin, path2_mid, path2_user, similar,
                        test_transition=True):
    del path2_user
    g = _prepare(params, x, path2_origin, path2_mid, similar)
    rank = RANK
    sp = lambda a: (a[:, :rank], a[:, rank:])
    HI = jax.lax.Precision.HIGHEST

    def mlp(v, w, b, wo, bo):
        h = jnp.maximum(jnp.dot(v, w, precision=HI) + b, 0.0)
        return jnp.dot(h, wo, precision=HI) + bo

    def cscore(a_re, a_im, b_re, b_im, r_re, r_im):
        q_re = a_re * b_re - a_im * b_im
        q_im = a_im * b_re + a_re * b_im
        return (jnp.dot(q_re, r_re.T, precision=HI)
                + jnp.dot(q_im, r_im.T, precision=HI))

    origin, tran, loc = sp(g["origin"]), sp(g["tran"]), sp(g["loc"])
    tim, inv, right = sp(g["tim"]), sp(g["inv"]), sp(g["right"])
    p2o, user1, sim, right_sim = sp(g["p2o"]), sp(g["user1"]), sp(g["sim"]), sp(g["right_sim"])

    rp1 = (mlp(g["path1_re"], params["w1"], params["b1"], params["wo"], params["bo"]),
           mlp(g["path1_im"], params["w1"], params["b1"], params["wo"], params["bo"]))
    rp2 = (mlp(g["path2_re"], params["w2"], params["b2"], params["wo"], params["bo"]),
           mlp(g["path2_im"], params["w2"], params["b2"], params["wo"], params["bo"]))

    sim_score = cscore(user1[0], user1[1], sim[0], sim[1], right_sim[0], right_sim[1])
    if test_transition:
        score = cscore(origin[0], origin[1], tran[0], tran[1], right[0], right[1])
    else:
        score = cscore(tim[0], tim[1], inv[0], inv[1], right[0], right[1])
    score3 = cscore(origin[0], origin[1], rp1[0], rp1[1], right[0], right[1])
    score4 = cscore(p2o[0], p2o[1], rp2[0], rp2[1], right[0], right[1])
    mods = (jnp.sqrt(origin[0] ** 2 + origin[1] ** 2),
            jnp.sqrt(tran[0] ** 2 + tran[1] ** 2),
            jnp.sqrt(loc[0] ** 2 + loc[1] ** 2))
    return score, sim_score, score3, score4, mods


def complex_forward(params, x, path2_origin, path2_mid, path2_user, similar,
                    test_transition=True, use_pallas=True):
    fn = complex_forward_pallas if use_pallas else complex_forward_ref
    return fn(params, x, path2_origin, path2_mid, path2_user, similar, test_transition)


# --------------------------------- main --------------------------------------

if __name__ == "__main__":
    key = jax.random.PRNGKey(0)
    kp, kx, kp2o, kp2m, kp2u, ksim0, ksim1 = jax.random.split(key, 7)

    params = init_params(kp)

    B, P, S = 8, 8, 8
    # x columns used: 1,2,3,4,5,6,7,8 — all tables have 16 rows here.
    x = jax.random.randint(kx, (B, 9), 0, 16, dtype=jnp.int32)
    path2_origin = jax.random.randint(kp2o, (P,), 0, SIZES[2], dtype=jnp.int32)
    path2_mid = jax.random.randint(kp2m, (P,), 0, SIZES[2], dtype=jnp.int32)
    path2_user = jax.random.randint(kp2u, (P,), 0, SIZES[0], dtype=jnp.int32)  # unused (as in torch)
    similar = jnp.stack(
        [jax.random.randint(ksim0, (S,), 0, SIZES[0], dtype=jnp.int32),
         jax.random.randint(ksim1, (S,), 0, SIZES[7], dtype=jnp.int32)], axis=1)

    outs = jax.block_until_ready(
        complex_forward(params, x, path2_origin, path2_mid, path2_user, similar,
                        use_pallas=True))
    refs = jax.block_until_ready(
        complex_forward(params, x, path2_origin, path2_mid, path2_user, similar,
                        use_pallas=False))

    flat_o, _ = jax.tree_util.tree_flatten(outs)
    flat_r, _ = jax.tree_util.tree_flatten(refs)
    for o, r in zip(flat_o, flat_r):
        np.testing.assert_allclose(np.asarray(o), np.asarray(r), rtol=2e-2, atol=1e-6)

    print("KERNEL_OK")
</pallas_src>

<mosaic_0001>
module attributes {stable_mosaic.version = 11 : i64} {
  func.func @_fused_forward_kernel(%arg0: memref<16x160xf32, #tpu.memory_space<vmem>>, %arg1: memref<16x96xf32, #tpu.memory_space<vmem>>, %arg2: memref<160x200xf32, #tpu.memory_space<vmem>>, %arg3: memref<1x200xf32, #tpu.memory_space<vmem>>, %arg4: memref<96x200xf32, #tpu.memory_space<vmem>>, %arg5: memref<1x200xf32, #tpu.memory_space<vmem>>, %arg6: memref<200x32xf32, #tpu.memory_space<vmem>>, %arg7: memref<1x32xf32, #tpu.memory_space<vmem>>, %arg8: memref<24x32xf32, #tpu.memory_space<vmem>>, %arg9: memref<24x32xf32, #tpu.memory_space<vmem>>, %arg10: memref<8x32xf32, #tpu.memory_space<vmem>>, %arg11: memref<8x32xf32, #tpu.memory_space<vmem>>, %arg12: memref<24x32xf32, #tpu.memory_space<vmem>>, %arg13: memref<24x32xf32, #tpu.memory_space<vmem>>, %arg14: memref<8x32xf32, #tpu.memory_space<vmem>>, %arg15: memref<8x32xf32, #tpu.memory_space<vmem>>, %arg16: memref<8x32xf32, #tpu.memory_space<vmem>>, %arg17: memref<8x32xf32, #tpu.memory_space<vmem>>, %arg18: memref<32x16xf32, #tpu.memory_space<vmem>>, %arg19: memref<32x16xf32, #tpu.memory_space<vmem>>, %arg20: memref<32x16xf32, #tpu.memory_space<vmem>>, %arg21: memref<32x16xf32, #tpu.memory_space<vmem>>, %arg22: memref<24x16xf32, #tpu.memory_space<vmem>>, %arg23: memref<8x16xf32, #tpu.memory_space<vmem>>, %arg24: memref<24x32xf32, #tpu.memory_space<vmem>>, %arg25: memref<24x32xf32, #tpu.memory_space<vmem>>, %arg26: memref<24x32xf32, #tpu.memory_space<vmem>>) attributes {dimension_semantics = [], scalar_prefetch = 0 : i64, scratch_operands = 2 : i64, tpu.core_type = #tpu.core_type<tc>} {
    %c0 = arith.constant 0 : index
    %c0_0 = arith.constant 0 : index
    %0 = vector.load %arg0[%c0, %c0_0] : memref<16x160xf32, #tpu.memory_space<vmem>>, vector<16x160xf32>
    %c0_1 = arith.constant 0 : index
    %c0_2 = arith.constant 0 : index
    %1 = vector.load %arg2[%c0_1, %c0_2] : memref<160x200xf32, #tpu.memory_space<vmem>>, vector<160x200xf32>
    %cst = arith.constant dense<0.000000e+00> : vector<16x200xf32>
    %2 = tpu.matmul %0, %1, %cst {dimension_numbers = #tpu.dot_dimension_numbers<[1], [0], [0], [1], [0, 0, 1, 1], [], []>} : vector<16x160xf32>, vector<160x200xf32>, vector<16x200xf32> -> vector<16x200xf32>
    %c0_3 = arith.constant 0 : index
    %c0_4 = arith.constant 0 : index
    %3 = vector.load %arg3[%c0_3, %c0_4] : memref<1x200xf32, #tpu.memory_space<vmem>>, vector<1x200xf32>
    %4 = vector.broadcast %3 : vector<1x200xf32> to vector<16x200xf32>
    %5 = arith.addf %2, %4 : vector<16x200xf32>
    %cst_5 = arith.constant 0.000000e+00 : f32
    %6 = vector.broadcast %cst_5 : f32 to vector<16x200xf32>
    %7 = arith.maximumf %5, %6 : vector<16x200xf32>
    %c0_6 = arith.constant 0 : index
    %c0_7 = arith.constant 0 : index
    %8 = vector.load %arg6[%c0_6, %c0_7] : memref<200x32xf32, #tpu.memory_space<vmem>>, vector<200x32xf32>
    %cst_8 = arith.constant dense<0.000000e+00> : vector<16x32xf32>
    %9 = tpu.matmul %7, %8, %cst_8 {dimension_numbers = #tpu.dot_dimension_numbers<[1], [0], [0], [1], [0, 0, 1, 1], [], []>} : vector<16x200xf32>, vector<200x32xf32>, vector<16x32xf32> -> vector<16x32xf32>
    %c0_9 = arith.constant 0 : index
    %c0_10 = arith.constant 0 : index
    %10 = vector.load %arg7[%c0_9, %c0_10] : memref<1x32xf32, #tpu.memory_space<vmem>>, vector<1x32xf32>
    %11 = vector.broadcast %10 : vector<1x32xf32> to vector<16x32xf32>
    %12 = arith.addf %9, %11 : vector<16x32xf32>
    %c0_11 = arith.constant 0 : index
    %c0_12 = arith.constant 0 : index
    %13 = vector.load %arg1[%c0_11, %c0_12] : memref<16x96xf32, #tpu.memory_space<vmem>>, vector<16x96xf32>
    %c0_13 = arith.constant 0 : index
    %c0_14 = arith.constant 0 : index
    %14 = vector.load %arg4[%c0_13, %c0_14] : memref<96x200xf32, #tpu.memory_space<vmem>>, vector<96x200xf32>
    %cst_15 = arith.constant dense<0.000000e+00> : vector<16x200xf32>
    %15 = tpu.matmul %13, %14, %cst_15 {dimension_numbers = #tpu.dot_dimension_numbers<[1], [0], [0], [1], [0, 0, 1, 1], [], []>} : vector<16x96xf32>, vector<96x200xf32>, vector<16x200xf32> -> vector<16x200xf32>
    %c0_16 = arith.constant 0 : index
    %c0_17 = arith.constant 0 : index
    %16 = vector.load %arg5[%c0_16, %c0_17] : memref<1x200xf32, #tpu.memory_space<vmem>>, vector<1x200xf32>
    %17 = vector.broadcast %16 : vector<1x200xf32> to vector<16x200xf32>
    %18 = arith.addf %15, %17 : vector<16x200xf32>
    %cst_18 = arith.constant 0.000000e+00 : f32
    %19 = vector.broadcast %cst_18 : f32 to vector<16x200xf32>
    %20 = arith.maximumf %18, %19 : vector<16x200xf32>
    %c0_19 = arith.constant 0 : index
    %c0_20 = arith.constant 0 : index
    %21 = vector.load %arg6[%c0_19, %c0_20] : memref<200x32xf32, #tpu.memory_space<vmem>>, vector<200x32xf32>
    %cst_21 = arith.constant dense<0.000000e+00> : vector<16x32xf32>
    %22 = tpu.matmul %20, %21, %cst_21 {dimension_numbers = #tpu.dot_dimension_numbers<[1], [0], [0], [1], [0, 0, 1, 1], [], []>} : vector<16x200xf32>, vector<200x32xf32>, vector<16x32xf32> -> vector<16x32xf32>
    %c0_22 = arith.constant 0 : index
    %c0_23 = arith.constant 0 : index
    %23 = vector.load %arg7[%c0_22, %c0_23] : memref<1x32xf32, #tpu.memory_space<vmem>>, vector<1x32xf32>
    %24 = vector.broadcast %23 : vector<1x32xf32> to vector<16x32xf32>
    %25 = arith.addf %22, %24 : vector<16x32xf32>
    %c0_24 = arith.constant 0 : index
    %c0_25 = arith.constant 0 : index
    %26 = vector.load %arg10[%c0_24, %c0_25] : memref<8x32xf32, #tpu.memory_space<vmem>>, vector<8x32xf32>
    %c0_26 = arith.constant 0 : index
    %c0_27 = arith.constant 0 : index
    %27 = vector.load %arg25[%c0_26, %c0_27] : memref<24x32xf32, #tpu.memory_space<vmem>>, vector<8x32xf32>
    tpu.vector_store %arg25[%c0_26, %c0_27], %26 {strides = array<i32>} : memref<24x32xf32, #tpu.memory_space<vmem>>, vector<8x32xf32>,
    %c0_28 = arith.constant 0 : index
    %c0_29 = arith.constant 0 : index
    %28 = vector.load %arg11[%c0_28, %c0_29] : memref<8x32xf32, #tpu.memory_space<vmem>>, vector<8x32xf32>
    %c0_30 = arith.constant 0 : index
    %c0_31 = arith.constant 0 : index
    %29 = vector.load %arg26[%c0_30, %c0_31] : memref<24x32xf32, #tpu.memory_space<vmem>>, vector<8x32xf32>
    tpu.vector_store %arg26[%c0_30, %c0_31], %28 {strides = array<i32>} : memref<24x32xf32, #tpu.memory_space<vmem>>, vector<8x32xf32>,
    %30 = vector.extract_strided_slice %12 {offsets = [0, 0], sizes = [8, 32], strides = [1, 1]} : vector<16x32xf32> to vector<8x32xf32>
    %c8 = arith.constant 8 : index
    %c0_32 = arith.constant 0 : index
    %31 = vector.load %arg25[%c8, %c0_32] : memref<24x32xf32, #tpu.memory_space<vmem>>, vector<8x32xf32>
    tpu.vector_store %arg25[%c8, %c0_32], %30 {strides = array<i32>} : memref<24x32xf32, #tpu.memory_space<vmem>>, vector<8x32xf32>,
    %32 = vector.extract_strided_slice %12 {offsets = [8, 0], sizes = [8, 32], strides = [1, 1]} : vector<16x32xf32> to vector<8x32xf32>
    %c8_33 = arith.constant 8 : index
    %c0_34 = arith.constant 0 : index
    %33 = vector.load %arg26[%c8_33, %c0_34] : memref<24x32xf32, #tpu.memory_space<vmem>>, vector<8x32xf32>
    tpu.vector_store %arg26[%c8_33, %c0_34], %32 {strides = array<i32>} : memref<24x32xf32, #tpu.memory_space<vmem>>, vector<8x32xf32>,
    %34 = vector.extract_strided_slice %25 {offsets = [0, 0], sizes = [8, 32], strides = [1, 1]} : vector<16x32xf32> to vector<8x32xf32>
    %c16 = arith.constant 16 : index
    %c0_35 = arith.constant 0 : index
    %35 = vector.load %arg25[%c16, %c0_35] : memref<24x32xf32, #tpu.memory_space<vmem>>, vector<8x32xf32>
    tpu.vector_store %arg25[%c16, %c0_35], %34 {strides = array<i32>} : memref<24x32xf32, #tpu.memory_space<vmem>>, vector<8x32xf32>,
    %36 = vector.extract_strided_slice %25 {offsets = [8, 0], sizes = [8, 32], strides = [1, 1]} : vector<16x32xf32> to vector<8x32xf32>
    %c16_36 = arith.constant 16 : index
    %c0_37 = arith.constant 0 : index
    %37 = vector.load %arg26[%c16_36, %c0_37] : memref<24x32xf32, #tpu.memory_space<vmem>>, vector<8x32xf32>
    tpu.vector_store %arg26[%c16_36, %c0_37], %36 {strides = array<i32>} : memref<24x32xf32, #tpu.memory_space<vmem>>, vector<8x32xf32>,
    %c0_38 = arith.constant 0 : index
    %c0_39 = arith.constant 0 : index
    %38 = vector.load %arg8[%c0_38, %c0_39] : memref<24x32xf32, #tpu.memory_space<vmem>>, vector<24x32xf32>
    %c0_40 = arith.constant 0 : index
    %c0_41 = arith.constant 0 : index
    %39 = vector.load %arg9[%c0_40, %c0_41] : memref<24x32xf32, #tpu.memory_space<vmem>>, vector<24x32xf32>
    %c0_42 = arith.constant 0 : index
    %c0_43 = arith.constant 0 : index
    %40 = vector.load %arg25[%c0_42, %c0_43] : memref<24x32xf32, #tpu.memory_space<vmem>>, vector<24x32xf32>
    %c0_44 = arith.constant 0 : index
    %c0_45 = arith.constant 0 : index
    %41 = vector.load %arg26[%c0_44, %c0_45] : memref<24x32xf32, #tpu.memory_space<vmem>>, vector<24x32xf32>
    %42 = arith.mulf %38, %40 : vector<24x32xf32>
    %43 = arith.mulf %39, %41 : vector<24x32xf32>
    %44 = arith.subf %42, %43 : vector<24x32xf32>
    %45 = arith.mulf %39, %40 : vector<24x32xf32>
    %46 = arith.mulf %38, %41 : vector<24x32xf32>
    %47 = arith.addf %45, %46 : vector<24x32xf32>
    %c0_46 = arith.constant 0 : index
    %c0_47 = arith.constant 0 : index
    %48 = vector.load %arg18[%c0_46, %c0_47] : memref<32x16xf32, #tpu.memory_space<vmem>>, vector<32x16xf32>
    %cst_48 = arith.constant dense<0.000000e+00> : vector<24x16xf32>
    %49 = tpu.matmul %44, %48, %cst_48 {dimension_numbers = #tpu.dot_dimension_numbers<[1], [0], [0], [1], [0, 0, 1, 1], [], []>} : vector<24x32xf32>, vector<32x16xf32>, vector<24x16xf32> -> vector<24x16xf32>
    %c0_49 = arith.constant 0 : index
    %c0_50 = arith.constant 0 : index
    %50 = vector.load %arg19[%c0_49, %c0_50] : memref<32x16xf32, #tpu.memory_space<vmem>>, vector<32x16xf32>
    %cst_51 = arith.constant dense<0.000000e+00> : vector<24x16xf32>
    %51 = tpu.matmul %47, %50, %cst_51 {dimension_numbers = #tpu.dot_dimension_numbers<[1], [0], [0], [1], [0, 0, 1, 1], [], []>} : vector<24x32xf32>, vector<32x16xf32>, vector<24x16xf32> -> vector<24x16xf32>
    %52 = arith.addf %49, %51 : vector<24x16xf32>
    %c0_52 = arith.constant 0 : index
    %c0_53 = arith.constant 0 : index
    %53 = vector.load %arg22[%c0_52, %c0_53] : memref<24x16xf32, #tpu.memory_space<vmem>>, vector<24x16xf32>
    tpu.vector_store %arg22[%c0_52, %c0_53], %52 {strides = array<i32>} : memref<24x16xf32, #tpu.memory_space<vmem>>, vector<24x16xf32>,
    %c0_54 = arith.constant 0 : index
    %c0_55 = arith.constant 0 : index
    %54 = vector.load %arg14[%c0_54, %c0_55] : memref<8x32xf32, #tpu.memory_space<vmem>>, vector<8x32xf32>
    %c0_56 = arith.constant 0 : index
    %c0_57 = arith.constant 0 : index
    %55 = vector.load %arg15[%c0_56, %c0_57] : memref<8x32xf32, #tpu.memory_space<vmem>>, vector<8x32xf32>
    %c0_58 = arith.constant 0 : index
    %c0_59 = arith.constant 0 : index
    %56 = vector.load %arg16[%c0_58, %c0_59] : memref<8x32xf32, #tpu.memory_space<vmem>>, vector<8x32xf32>
    %c0_60 = arith.constant 0 : index
    %c0_61 = arith.constant 0 : index
    %57 = vector.load %arg17[%c0_60, %c0_61] : memref<8x32xf32, #tpu.memory_space<vmem>>, vector<8x32xf32>
    %58 = arith.mulf %54, %56 : vector<8x32xf32>
    %59 = arith.mulf %55, %57 : vector<8x32xf32>
    %60 = arith.subf %58, %59 : vector<8x32xf32>
    %61 = arith.mulf %55, %56 : vector<8x32xf32>
    %62 = arith.mulf %54, %57 : vector<8x32xf32>
    %63 = arith.addf %61, %62 : vector<8x32xf32>
    %c0_62 = arith.constant 0 : index
    %c0_63 = arith.constant 0 : index
    %64 = vector.load %arg20[%c0_62, %c0_63] : memref<32x16xf32, #tpu.memory_space<vmem>>, vector<32x16xf32>
    %cst_64 = arith.constant dense<0.000000e+00> : vector<8x16xf32>
    %65 = tpu.matmul %60, %64, %cst_64 {dimension_numbers = #tpu.dot_dimension_numbers<[1], [0], [0], [1], [0, 0, 1, 1], [], []>} : vector<8x32xf32>, vector<32x16xf32>, vector<8x16xf32> -> vector<8x16xf32>
    %c0_65 = arith.constant 0 : index
    %c0_66 = arith.constant 0 : index
    %66 = vector.load %arg21[%c0_65, %c0_66] : memref<32x16xf32, #tpu.memory_space<vmem>>, vector<32x16xf32>
    %cst_67 = arith.constant dense<0.000000e+00> : vector<8x16xf32>
    %67 = tpu.matmul %63, %66, %cst_67 {dimension_numbers = #tpu.dot_dimension_numbers<[1], [0], [0], [1], [0, 0, 1, 1], [], []>} : vector<8x32xf32>, vector<32x16xf32>, vector<8x16xf32> -> vector<8x16xf32>
    %68 = arith.addf %65, %67 : vector<8x16xf32>
    %c0_68 = arith.constant 0 : index
    %c0_69 = arith.constant 0 : index
    %69 = vector.load %arg23[%c0_68, %c0_69] : memref<8x16xf32, #tpu.memory_space<vmem>>, vector<8x16xf32>
    tpu.vector_store %arg23[%c0_68, %c0_69], %68 {strides = array<i32>} : memref<8x16xf32, #tpu.memory_space<vmem>>, vector<8x16xf32>,
    %c0_70 = arith.constant 0 : index
    %c0_71 = arith.constant 0 : index
    %70 = vector.load %arg12[%c0_70, %c0_71] : memref<24x32xf32, #tpu.memory_space<vmem>>, vector<24x32xf32>
    %c0_72 = arith.constant 0 : index
    %c0_73 = arith.constant 0 : index
    %71 = vector.load %arg13[%c0_72, %c0_73] : memref<24x32xf32, #tpu.memory_space<vmem>>, vector<24x32xf32>
    %72 = arith.mulf %70, %70 : vector<24x32xf32>
    %73 = arith.mulf %71, %71 : vector<24x32xf32>
    %74 = arith.addf %72, %73 : vector<24x32xf32>
    %75 = math.sqrt %74 : vector<24x32xf32>
    %c0_74 = arith.constant 0 : index
    %c0_75 = arith.constant 0 : index
    %76 = vector.load %arg24[%c0_74, %c0_75] : memref<24x32xf32, #tpu.memory_space<vmem>>, vector<24x32xf32>
    tpu.vector_store %arg24[%c0_74, %c0_75], %75 {strides = array<i32>} : memref<24x32xf32, #tpu.memory_space<vmem>>, vector<24x32xf32>,
    return
  }
}

</mosaic_0001>

<llo_original>
// kernel: tpu_custom_call.1
$region0: #{tpu_custom_call.1}
  #allocation0 [shape = 'u32[]', space=smem, size = 0x4, offset = 0x4, fixed_abs, tag = 'smem constant byte address 0x4 - core index']
  #allocation1 [shape = 'u32[144,128]{1,0:T(1,128)}', space=vmem, size = 0x12000, scoped, tag = 'internal scratch']
  #allocation2 [shape = 'f32[24,32]{1,0:T(8,128)}', space=vmem, size = 0x3000, scoped, tag = 'scratch operand']
  #allocation3 [shape = 'f32[24,32]{1,0:T(8,128)}', space=vmem, size = 0x3000, scoped, tag = 'scratch operand']
  %s0 = inlined_call_operand.vmem [shape: f32[16,160], index: 0, kind: input, shape index: {}]
  %s1 = inlined_call_operand.hbm [shape: f32[16,96], index: 1, kind: input, shape index: {}]
  %s2 = inlined_call_operand.vmem [shape: f32[160,200], index: 2, kind: input, shape index: {}]
  %s3 = inlined_call_operand.hbm [shape: f32[1,200], index: 3, kind: input, shape index: {}]
  %s4 = inlined_call_operand.hbm [shape: f32[96,200], index: 4, kind: input, shape index: {}]
  %s5 = inlined_call_operand.hbm [shape: f32[1,200], index: 5, kind: input, shape index: {}]
  %s6 = inlined_call_operand.vmem [shape: f32[200,32], index: 6, kind: input, shape index: {}]
  %s7 = inlined_call_operand.hbm [shape: f32[1,32], index: 7, kind: input, shape index: {}]
  %s8 = inlined_call_operand.vmem [shape: f32[24,32], index: 8, kind: input, shape index: {}]
  %s9 = inlined_call_operand.vmem [shape: f32[24,32], index: 9, kind: input, shape index: {}]
  %s10 = inlined_call_operand.hbm [shape: f32[8,32], index: 10, kind: input, shape index: {}]
  %s11 = inlined_call_operand.hbm [shape: f32[8,32], index: 11, kind: input, shape index: {}]
  %s12 = inlined_call_operand.vmem [shape: f32[24,32], index: 12, kind: input, shape index: {}]
  %s13 = inlined_call_operand.hbm [shape: f32[24,32], index: 13, kind: input, shape index: {}]
  %s14 = inlined_call_operand.hbm [shape: f32[8,32], index: 14, kind: input, shape index: {}]
  %s15 = inlined_call_operand.hbm [shape: f32[8,32], index: 15, kind: input, shape index: {}]
  %s16 = inlined_call_operand.hbm [shape: f32[8,32], index: 16, kind: input, shape index: {}]
  %s17 = inlined_call_operand.hbm [shape: f32[8,32], index: 17, kind: input, shape index: {}]
  %s18 = inlined_call_operand.vmem [shape: f32[32,16], index: 18, kind: input, shape index: {}]
  %s19 = inlined_call_operand.vmem [shape: f32[32,16], index: 19, kind: input, shape index: {}]
  %s20 = inlined_call_operand.vmem [shape: f32[32,16], index: 20, kind: input, shape index: {}]
  %s21 = inlined_call_operand.vmem [shape: f32[32,16], index: 21, kind: input, shape index: {}]
  %s22 = inlined_call_operand.vmem [shape: f32[24,16], index: 22, kind: output, shape index: {0}]
  %s23 = inlined_call_operand.hbm [shape: f32[8,16], index: 23, kind: output, shape index: {1}]
  %s24 = inlined_call_operand.hbm [shape: f32[24,32], index: 24, kind: output, shape index: {2}]
  %25 = xla_tuple %s22, %s23, %s24
  %s26 = sld [smem:[#allocation0]]
  $region162: #{tpu_custom_call.1} parent=0
    _
  %s28 = ssub.s32 1, %s26
  %s29 = scalar_select 0, %s28, %s26
  $region1: #{tpu_custom_call.1} parent=0
    #allocation4 [shape = 'u8[8192]{0}', space=vmem, size = 0x2000, scoped, tag = 'input window, operand 1, single buffered']
    #allocation5 [shape = 's32[1]{0}', space=sflag, size = 0x4, scoped, tag = 'scoped memory for tpu_custom_call.1']
    #allocation6 [shape = 's32[1]{0}', space=sflag, size = 0x4, scoped, tag = 'scoped memory for tpu_custom_call.1']
    #allocation7 [shape = 'u8[1024]{0}', space=vmem, size = 0x400, scoped, tag = 'input window, operand 3, single buffered']
    #allocation8 [shape = 's32[1]{0}', space=sflag, size = 0x4, scoped, tag = 'scoped memory for tpu_custom_call.1']
    #allocation9 [shape = 'u8[98304]{0}', space=vmem, size = 0x18000, scoped, tag = 'input window, operand 4, single buffered']
    #allocation10 [shape = 'u8[1024]{0}', space=vmem, size = 0x400, scoped, tag = 'input window, operand 5, single buffered']
    #allocation11 [shape = 's32[1]{0}', space=sflag, size = 0x4, scoped, tag = 'scoped memory for tpu_custom_call.1']
    #allocation12 [shape = 'u8[512]{0}', space=vmem, size = 0x400, scoped, tag = 'input window, operand 7, single buffered']
    #allocation13 [shape = 'u8[4096]{0}', space=vmem, size = 0x1000, scoped, tag = 'input window, operand 10, single buffered']
    #allocation14 [shape = 's32[1]{0}', space=sflag, size = 0x4, scoped, tag = 'scoped memory for tpu_custom_call.1']
    #allocation15 [shape = 'u8[4096]{0}', space=vmem, size = 0x1000, scoped, tag = 'input window, operand 11, single buffered']
    #allocation16 [shape = 'u8[12288]{0}', space=vmem, size = 0x3000, scoped, tag = 'input window, operand 13, single buffered']
    #allocation17 [shape = 's32[1]{0}', space=sflag, size = 0x4, scoped, tag = 'scoped memory for tpu_custom_call.1']
    #allocation18 [shape = 'u8[4096]{0}', space=vmem, size = 0x1000, scoped, tag = 'input window, operand 14, single buffered']
    #allocation19 [shape = 'u8[4096]{0}', space=vmem, size = 0x1000, scoped, tag = 'input window, operand 15, single buffered']
    #allocation20 [shape = 's32[1]{0}', space=sflag, size = 0x4, scoped, tag = 'scoped memory for tpu_custom_call.1']
    #allocation21 [shape = 'u8[4096]{0}', space=vmem, size = 0x1000, scoped, tag = 'input window, operand 16, single buffered']
    #allocation22 [shape = 'u8[4096]{0}', space=vmem, size = 0x1000, scoped, tag = 'input window, operand 17, single buffered']
    #allocation23 [shape = 's32[1]{0}', space=sflag, size = 0x4, scoped, tag = 'scoped memory for tpu_custom_call.1']
    #allocation24 [shape = 'u8[4096]{0}', space=vmem, size = 0x1000, scoped, tag = 'output window, operand 1, single buffered']
    #allocation25 [shape = 'u8[12288]{0}', space=vmem, size = 0x3000, scoped, tag = 'output window, operand 2, single buffered']
    #allocation26 [shape = 's32[1]{0}', space=sflag, size = 0x4, scoped, tag = 'scoped memory for tpu_custom_call.1']
    %30 = vsyncpa [#allocation5], 0
    %31 = vsyncpa [#allocation8], 0
    %32 = vsyncpa [#allocation11], 0
    %33 = vsyncpa [#allocation14], 0
    %34 = vsyncpa [#allocation17], 0
    %35 = vsyncpa [#allocation20], 0
    %36 = vsyncpa [#allocation23], 0
    %37 = vsyncpa [#allocation6], 0
    %38 = vsyncpa [#allocation26], 0
    // Predicated region
    $region2: #{tpu_custom_call.1} parent=1 // pred_check
      _
    $region3: #{tpu_custom_call.1} parent=1 // pred_check_branch
      %40 = sbr.rel (0) target = $region5
    $region4: #{tpu_custom_call.1} parent=1 // pred_region
      _
    $region5: #{tpu_custom_call.1} parent=1 // pred_fallthru
      _
    // Predicated region
    $region6: #{tpu_custom_call.1} parent=1 // pred_check
      _
    $region7: #{tpu_custom_call.1} parent=1 // pred_check_branch
      %42 = sbr.rel (0) target = $region9
    $region8: #{tpu_custom_call.1} parent=1 // pred_region
      %s44 = ssub.s32 256, 256
      %45 = vsyncadd [#allocation5], %s44
      %s46 = sshll.u32 [#allocation4], 4
      %s47 = int_to_ptr.vmem [resolvable:$true] %s46
      %52 = dma.hbm_to_vmem [thread:$0]  %s1, 256, %s47, [#allocation5], 128, 128, 8
    $region9: #{tpu_custom_call.1} parent=1 // pred_fallthru
      _
    // Predicated region
    $region10: #{tpu_custom_call.1} parent=1 // pred_check
      _
    $region11: #{tpu_custom_call.1} parent=1 // pred_check_branch
      %54 = sbr.rel (0) target = $region13
    $region12: #{tpu_custom_call.1} parent=1 // pred_region
      _
    $region13: #{tpu_custom_call.1} parent=1 // pred_fallthru
      _
    // Predicated region
    $region14: #{tpu_custom_call.1} parent=1 // pred_check
      _
    $region15: #{tpu_custom_call.1} parent=1 // pred_check_branch
      %56 = sbr.rel (0) target = $region17
    $region16: #{tpu_custom_call.1} parent=1 // pred_region
      %s58 = ssub.s32 32, 32
      %59 = vsyncadd [#allocation8], %s58
      %s61 = sshll.u32 [#allocation7], 4
      %s62 = int_to_ptr.vmem [resolvable:$true] %s61
      %64 = dma.hbm_to_vmem [thread:$0]  %s3, 32, %s62, [#allocation8]
    $region17: #{tpu_custom_call.1} parent=1 // pred_fallthru
      _
    // Predicated region
    $region18: #{tpu_custom_call.1} parent=1 // pred_check
      _
    $region19: #{tpu_custom_call.1} parent=1 // pred_check_branch
      %66 = sbr.rel (0) target = $region21
    $region20: #{tpu_custom_call.1} parent=1 // pred_region
      %s68 = ssub.s32 3072, 3072
      %69 = vsyncadd [#allocation8], %s68
      %s70 = sshll.u32 [#allocation9], 4
      %s71 = int_to_ptr.vmem [resolvable:$true] %s70
      %76 = dma.hbm_to_vmem [thread:$0]  %s4, 3072, %s71, [#allocation8], 256, 256, 16
    $region21: #{tpu_custom_call.1} parent=1 // pred_fallthru
      _
    // Predicated region
    $region22: #{tpu_custom_call.1} parent=1 // pred_check
      _
    $region23: #{tpu_custom_call.1} parent=1 // pred_check_branch
      %78 = sbr.rel (0) target = $region25
    $region24: #{tpu_custom_call.1} parent=1 // pred_region
      %s80 = ssub.s32 32, 32
      %81 = vsyncadd [#allocation11], %s80
      %s83 = sshll.u32 [#allocation10], 4
      %s84 = int_to_ptr.vmem [resolvable:$true] %s83
      %86 = dma.hbm_to_vmem [thread:$0]  %s5, 32, %s84, [#allocation11]
    $region25: #{tpu_custom_call.1} parent=1 // pred_fallthru
      _
    // Predicated region
    $region26: #{tpu_custom_call.1} parent=1 // pred_check
      _
    $region27: #{tpu_custom_call.1} parent=1 // pred_check_branch
      %88 = sbr.rel (0) target = $region29
    $region28: #{tpu_custom_call.1} parent=1 // pred_region
      _
    $region29: #{tpu_custom_call.1} parent=1 // pred_fallthru
      _
    // Predicated region
    $region30: #{tpu_custom_call.1} parent=1 // pred_check
      _
    $region31: #{tpu_custom_call.1} parent=1 // pred_check_branch
      %90 = sbr.rel (0) target = $region33
    $region32: #{tpu_custom_call.1} parent=1 // pred_region
      %s92 = ssub.s32 16, 16
      %93 = vsyncadd [#allocation11], %s92
      %s95 = sshll.u32 [#allocation12], 4
      %s96 = int_to_ptr.vmem [resolvable:$true] %s95
      %98 = dma.hbm_to_vmem [thread:$0]  %s7, 16, %s96, [#allocation11]
    $region33: #{tpu_custom_call.1} parent=1 // pred_fallthru
      _
    // Predicated region
    $region34: #{tpu_custom_call.1} parent=1 // pred_check
      _
    $region35: #{tpu_custom_call.1} parent=1 // pred_check_branch
      %100 = sbr.rel (0) target = $region37
    $region36: #{tpu_custom_call.1} parent=1 // pred_region
      _
    $region37: #{tpu_custom_call.1} parent=1 // pred_fallthru
      _
    // Predicated region
    $region38: #{tpu_custom_call.1} parent=1 // pred_check
      _
    $region39: #{tpu_custom_call.1} parent=1 // pred_check_branch
      %102 = sbr.rel (0) target = $region41
    $region40: #{tpu_custom_call.1} parent=1 // pred_region
      _
    $region41: #{tpu_custom_call.1} parent=1 // pred_fallthru
      _
    // Predicated region
    $region42: #{tpu_custom_call.1} parent=1 // pred_check
      _
    $region43: #{tpu_custom_call.1} parent=1 // pred_check_branch
      %104 = sbr.rel (0) target = $region45
    $region44: #{tpu_custom_call.1} parent=1 // pred_region
      %s106 = ssub.s32 128, 128
      %107 = vsyncadd [#allocation14], %s106
      %s109 = sshll.u32 [#allocation13], 4
      %s110 = int_to_ptr.vmem [resolvable:$true] %s109
      %112 = dma.hbm_to_vmem [thread:$0]  %s10, 128, %s110, [#allocation14]
    $region45: #{tpu_custom_call.1} parent=1 // pred_fallthru
      _
    // Predicated region
    $region46: #{tpu_custom_call.1} parent=1 // pred_check
      _
    $region47: #{tpu_custom_call.1} parent=1 // pred_check_branch
      %114 = sbr.rel (0) target = $region49
    $region48: #{tpu_custom_call.1} parent=1 // pred_region
      %s116 = ssub.s32 128, 128
      %117 = vsyncadd [#allocation14], %s116
      %s119 = sshll.u32 [#allocation15], 4
      %s120 = int_to_ptr.vmem [resolvable:$true] %s119
      %122 = dma.hbm_to_vmem [thread:$0]  %s11, 128, %s120, [#allocation14]
    $region49: #{tpu_custom_call.1} parent=1 // pred_fallthru
      _
    // Predicated region
    $region50: #{tpu_custom_call.1} parent=1 // pred_check
      _
    $region51: #{tpu_custom_call.1} parent=1 // pred_check_branch
      %124 = sbr.rel (0) target = $region53
    $region52: #{tpu_custom_call.1} parent=1 // pred_region
      _
    $region53: #{tpu_custom_call.1} parent=1 // pred_fallthru
      _
    // Predicated region
    $region54: #{tpu_custom_call.1} parent=1 // pred_check
      _
    $region55: #{tpu_custom_call.1} parent=1 // pred_check_branch
      %126 = sbr.rel (0) target = $region57
    $region56: #{tpu_custom_call.1} parent=1 // pred_region
      %s128 = ssub.s32 384, 384
      %129 = vsyncadd [#allocation17], %s128
      %s130 = sshll.u32 [#allocation16], 4
      %s131 = int_to_ptr.vmem [resolvable:$true] %s130
      %136 = dma.hbm_to_vmem [thread:$0]  %s13, 384, %s131, [#allocation17], 128, 128, 8
    $region57: #{tpu_custom_call.1} parent=1 // pred_fallthru
      _
    // Predicated region
    $region58: #{tpu_custom_call.1} parent=1 // pred_check
      _
    $region59: #{tpu_custom_call.1} parent=1 // pred_check_branch
      %138 = sbr.rel (0) target = $region61
    $region60: #{tpu_custom_call.1} parent=1 // pred_region
      %s140 = ssub.s32 128, 128
      %141 = vsyncadd [#allocation17], %s140
      %s143 = sshll.u32 [#allocation18], 4
      %s144 = int_to_ptr.vmem [resolvable:$true] %s143
      %146 = dma.hbm_to_vmem [thread:$0]  %s14, 128, %s144, [#allocation17]
    $region61: #{tpu_custom_call.1} parent=1 // pred_fallthru
      _
    // Predicated region
    $region62: #{tpu_custom_call.1} parent=1 // pred_check
      _
    $region63: #{tpu_custom_call.1} parent=1 // pred_check_branch
      %148 = sbr.rel (0) target = $region65
    $region64: #{tpu_custom_call.1} parent=1 // pred_region
      %s150 = ssub.s32 128, 128
      %151 = vsyncadd [#allocation20], %s150
      %s153 = sshll.u32 [#allocation19], 4
      %s154 = int_to_ptr.vmem [resolvable:$true] %s153
      %156 = dma.hbm_to_vmem [thread:$0]  %s15, 128, %s154, [#allocation20]
    $region65: #{tpu_custom_call.1} parent=1 // pred_fallthru
      _
    // Predicated region
    $region66: #{tpu_custom_call.1} parent=1 // pred_check
      _
    $region67: #{tpu_custom_call.1} parent=1 // pred_check_branch
      %158 = sbr.rel (0) target = $region69
    $region68: #{tpu_custom_call.1} parent=1 // pred_region
      %s160 = ssub.s32 128, 128
      %161 = vsyncadd [#allocation20], %s160
      %s163 = sshll.u32 [#allocation21], 4
      %s164 = int_to_ptr.vmem [resolvable:$true] %s163
      %166 = dma.hbm_to_vmem [thread:$0]  %s16, 128, %s164, [#allocation20]
    $region69: #{tpu_custom_call.1} parent=1 // pred_fallthru
      _
    // Predicated region
    $region70: #{tpu_custom_call.1} parent=1 // pred_check
      _
    $region71: #{tpu_custom_call.1} parent=1 // pred_check_branch
      %168 = sbr.rel (0) target = $region73
    $region72: #{tpu_custom_call.1} parent=1 // pred_region
      %s170 = ssub.s32 128, 128
      %171 = vsyncadd [#allocation23], %s170
      %s173 = sshll.u32 [#allocation22], 4
      %s174 = int_to_ptr.vmem [resolvable:$true] %s173
      %176 = dma.hbm_to_vmem [thread:$0]  %s17, 128, %s174, [#allocation23]
    $region73: #{tpu_custom_call.1} parent=1 // pred_fallthru
      _
    // Predicated region
    $region74: #{tpu_custom_call.1} parent=1 // pred_check
      _
    $region75: #{tpu_custom_call.1} parent=1 // pred_check_branch
      %178 = sbr.rel (0) target = $region77
    $region76: #{tpu_custom_call.1} parent=1 // pred_region
      _
    $region77: #{tpu_custom_call.1} parent=1 // pred_fallthru
      _
    // Predicated region
    $region78: #{tpu_custom_call.1} parent=1 // pred_check
      _
    $region79: #{tpu_custom_call.1} parent=1 // pred_check_branch
      %180 = sbr.rel (0) target = $region81
    $region80: #{tpu_custom_call.1} parent=1 // pred_region
      _
    $region81: #{tpu_custom_call.1} parent=1 // pred_fallthru
      _
    // Predicated region
    $region82: #{tpu_custom_call.1} parent=1 // pred_check
      _
    $region83: #{tpu_custom_call.1} parent=1 // pred_check_branch
      %182 = sbr.rel (0) target = $region85
    $region84: #{tpu_custom_call.1} parent=1 // pred_region
      _
    $region85: #{tpu_custom_call.1} parent=1 // pred_fallthru
      _
    // Predicated region
    $region86: #{tpu_custom_call.1} parent=1 // pred_check
      _
    $region87: #{tpu_custom_call.1} parent=1 // pred_check_branch
      %184 = sbr.rel (0) target = $region89
    $region88: #{tpu_custom_call.1} parent=1 // pred_region
      _
    $region89: #{tpu_custom_call.1} parent=1 // pred_fallthru
      _
    // Predicated region
    $region90: #{tpu_custom_call.1} parent=1 // pred_check
      _
    $region91: #{tpu_custom_call.1} parent=1 // pred_check_branch
      %186 = sbr.rel (0) target = $region93
    $region92: #{tpu_custom_call.1} parent=1 // pred_region
      %187 = dma.done [#allocation5], 256
    $region93: #{tpu_custom_call.1} parent=1 // pred_fallthru
      _
    // Predicated region
    $region94: #{tpu_custom_call.1} parent=1 // pred_check
      _
    $region95: #{tpu_custom_call.1} parent=1 // pred_check_branch
      %189 = sbr.rel (0) target = $region97
    $region96: #{tpu_custom_call.1} parent=1 // pred_region
      %190 = dma.done [#allocation8], 32
    $region97: #{tpu_custom_call.1} parent=1 // pred_fallthru
      _
    // Predicated region
    $region98: #{tpu_custom_call.1} parent=1 // pred_check
      _
    $region99: #{tpu_custom_call.1} parent=1 // pred_check_branch
      %192 = sbr.rel (0) target = $region101
    $region100: #{tpu_custom_call.1} parent=1 // pred_region
      %193 = dma.done [#allocation8], 3072
    $region101: #{tpu_custom_call.1} parent=1 // pred_fallthru
      _
    // Predicated region
    $region102: #{tpu_custom_call.1} parent=1 // pred_check
      _
    $region103: #{tpu_custom_call.1} parent=1 // pred_check_branch
      %195 = sbr.rel (0) target = $region105
    $region104: #{tpu_custom_call.1} parent=1 // pred_region
      %196 = dma.done [#allocation11], 32
    $region105: #{tpu_custom_call.1} parent=1 // pred_fallthru
      _
    // Predicated region
    $region106: #{tpu_custom_call.1} parent=1 // pred_check
      _
    $region107: #{tpu_custom_call.1} parent=1 // pred_check_branch
      %198 = sbr.rel (0) target = $region109
    $region108: #{tpu_custom_call.1} parent=1 // pred_region
      %199 = dma.done [#allocation11], 16
    $region109: #{tpu_custom_call.1} parent=1 // pred_fallthru
      _
    // Predicated region
    $region110: #{tpu_custom_call.1} parent=1 // pred_check
      _
    $region111: #{tpu_custom_call.1} parent=1 // pred_check_branch
      %201 = sbr.rel (0) target = $region113
    $region112: #{tpu_custom_call.1} parent=1 // pred_region
      %202 = dma.done [#allocation14], 128
    $region113: #{tpu_custom_call.1} parent=1 // pred_fallthru
      _
    // Predicated region
    $region114: #{tpu_custom_call.1} parent=1 // pred_check
      _
    $region115: #{tpu_custom_call.1} parent=1 // pred_check_branch
      %204 = sbr.rel (0) target = $region117
    $region116: #{tpu_custom_call.1} parent=1 // pred_region
      %205 = dma.done [#allocation14], 128
    $region117: #{tpu_custom_call.1} parent=1 // pred_fallthru
      _
    // Predicated region
    $region118: #{tpu_custom_call.1} parent=1 // pred_check
      _
    $region119: #{tpu_custom_call.1} parent=1 // pred_check_branch
      %207 = sbr.rel (0) target = $region121
    $region120: #{tpu_custom_call.1} parent=1 // pred_region
      %208 = dma.done [#allocation17], 384
    $region121: #{tpu_custom_call.1} parent=1 // pred_fallthru
      _
    // Predicated region
    $region122: #{tpu_custom_call.1} parent=1 // pred_check
      _
    $region123: #{tpu_custom_call.1} parent=1 // pred_check_branch
      %210 = sbr.rel (0) target = $region125
    $region124: #{tpu_custom_call.1} parent=1 // pred_region
      %211 = dma.done [#allocation17], 128
    $region125: #{tpu_custom_call.1} parent=1 // pred_fallthru
      _
    // Predicated region
    $region126: #{tpu_custom_call.1} parent=1 // pred_check
      _
    $region127: #{tpu_custom_call.1} parent=1 // pred_check_branch
      %213 = sbr.rel (0) target = $region129
    $region128: #{tpu_custom_call.1} parent=1 // pred_region
      %214 = dma.done [#allocation20], 128
    $region129: #{tpu_custom_call.1} parent=1 // pred_fallthru
      _
    // Predicated region
    $region130: #{tpu_custom_call.1} parent=1 // pred_check
      _
    $region131: #{tpu_custom_call.1} parent=1 // pred_check_branch
      %216 = sbr.rel (0) target = $region133
    $region132: #{tpu_custom_call.1} parent=1 // pred_region
      %217 = dma.done [#allocation20], 128
    $region133: #{tpu_custom_call.1} parent=1 // pred_fallthru
      _
    // Predicated region
    $region134: #{tpu_custom_call.1} parent=1 // pred_check
      _
    $region135: #{tpu_custom_call.1} parent=1 // pred_check_branch
      %219 = sbr.rel (0) target = $region137
    $region136: #{tpu_custom_call.1} parent=1 // pred_region
      %220 = dma.done [#allocation23], 128
    $region137: #{tpu_custom_call.1} parent=1 // pred_fallthru
      _
    %v221 = vld [vmem:[%s0] sm:$0xff]
    %v222 = vld [vmem:[%s0 + $0x8] sm:$0xff]
    %v223 = vld [vmem:[%s0 + $0x10] sm:$0xff]
    %v224 = vld [vmem:[%s0 + $0x18] sm:$0xff]
    %v225 = vld [vmem:[%s2] sm:$0xff]
    %v226 = vld [vmem:[%s2 + $0x8] sm:$0xff]
    %v227 = vld [vmem:[%s2 + $0x10] sm:$0xff]
    %v228 = vld [vmem:[%s2 + $0x18] sm:$0xff]
    %v229 = vld [vmem:[%s2 + $0x20] sm:$0xff]
    %v230 = vld [vmem:[%s2 + $0x28] sm:$0xff]
    %v231 = vld [vmem:[%s2 + $0x30] sm:$0xff]
    %v232 = vld [vmem:[%s2 + $0x38] sm:$0xff]
    %v233 = vld [vmem:[%s2 + $0x40] sm:$0xff]
    %v234 = vld [vmem:[%s2 + $0x48] sm:$0xff]
    %v235 = vld [vmem:[%s2 + $0x50] sm:$0xff]
    %v236 = vld [vmem:[%s2 + $0x58] sm:$0xff]
    %v237 = vld [vmem:[%s2 + $0x60] sm:$0xff]
    %v238 = vld [vmem:[%s2 + $0x68] sm:$0xff]
    %v239 = vld [vmem:[%s2 + $0x70] sm:$0xff]
    %v240 = vld [vmem:[%s2 + $0x78] sm:$0xff]
    %v241 = vld [vmem:[%s2 + $0x80] sm:$0xff]
    %v242 = vld [vmem:[%s2 + $0x88] sm:$0xff]
    %v243 = vld [vmem:[%s2 + $0x90] sm:$0xff]
    %v244 = vld [vmem:[%s2 + $0x98] sm:$0xff]
    %v245 = vld [vmem:[%s2 + $0xa0] sm:$0xff]
    %v246 = vld [vmem:[%s2 + $0xa8] sm:$0xff]
    %v247 = vld [vmem:[%s2 + $0xb0] sm:$0xff]
    %v248 = vld [vmem:[%s2 + $0xb8] sm:$0xff]
    %v249 = vld [vmem:[%s2 + $0xc0] sm:$0xff]
    %v250 = vld [vmem:[%s2 + $0xc8] sm:$0xff]
    %v251 = vld [vmem:[%s2 + $0xd0] sm:$0xff]
    %v252 = vld [vmem:[%s2 + $0xd8] sm:$0xff]
    %v253 = vld [vmem:[%s2 + $0xe0] sm:$0xff]
    %v254 = vld [vmem:[%s2 + $0xe8] sm:$0xff]
    %v255 = vld [vmem:[%s2 + $0xf0] sm:$0xff]
    %v256 = vld [vmem:[%s2 + $0xf8] sm:$0xff]
    %v257 = vld [vmem:[%s2 + $0x100] sm:$0xff]
    %v258 = vld [vmem:[%s2 + $0x108] sm:$0xff]
    %v259 = vld [vmem:[%s2 + $0x110] sm:$0xff]
    %v260 = vld [vmem:[%s2 + $0x118] sm:$0xff]
    %v261 = vld [vmem:[%s2 + $0x120] sm:$0xff]
    %v262 = vld [vmem:[%s2 + $0x128] sm:$0xff]
    %v263 = vld [vmem:[%s2 + $0x130] sm:$0xff]
    %v264 = vld [vmem:[%s2 + $0x138] sm:$0xff]
    %v265 = vld [vmem:[#allocation7] sm:$0x3]
    %v267 = vlaneseq
    %v268 = vshrl.u32 %v267, 7
    %v269 = vsub.s32 0, %v268
    %v270 = vrot.slane %v265, %v269
    %v271 = vlaneseq
    %v272 = vshrl.u32 %v271, 7
    %v273 = vsub.s32 1, %v272
    %v274 = vrot.slane %v265, %v273
    %vm277 = vcmask 261120
    %v279 = vsel %vm277, %v222, 0
    %v282 = vsel %vm277, %v224, 0
    %284 = vmatprep.subr.mxu0 %v226
    %285 = vmatpush1.msra.mxu0 %v225
    %286 = vmatprep.subr.mxu0 %v228
    %287 = vmatpush1.msra.mxu0 %v227
    %288 = vmatprep.subr.mxu0 %v230
    %289 = vmatpush1.msra.mxu0 %v229
    %290 = vmatprep.subr.mxu0 %v232
    %291 = vmatpush1.msra.mxu0 %v231
    %292 = vmatprep.subr.mxu0 %v234
    %293 = vmatpush1.msra.mxu0 %v233
    %294 = vmatprep.subr.mxu0 %v236
    %295 = vmatpush1.msra.mxu0 %v235
    %296 = vmatprep.subr.mxu0 %v238
    %297 = vmatpush1.msra.mxu0 %v237
    %298 = vmatprep.subr.mxu0 %v240
    %299 = vmatpush1.msra.mxu0 %v239
    %300 = vmatprep.subr.mxu0 %v242
    %301 = vmatpush1.msra.mxu0 %v241
    %302 = vmatprep.subr.mxu0 %v244
    %303 = vmatpush1.msra.mxu0 %v243
    %304 = vmatprep.subr.mxu0 %v246
    %305 = vmatpush1.msra.mxu0 %v245
    %306 = vmatprep.subr.mxu0 %v248
    %307 = vmatpush1.msra.mxu0 %v247
    %308 = vmatprep.subr.mxu0 %v250
    %309 = vmatpush1.msra.mxu0 %v249
    %310 = vmatprep.subr.mxu0 %v252
    %311 = vmatpush1.msra.mxu0 %v251
    %312 = vmatprep.subr.mxu0 %v254
    %313 = vmatpush1.msra.mxu0 %v253
    %314 = vmatprep.subr.mxu0 %v256
    %315 = vmatpush1.msra.mxu0 %v255
    %316 = vmatprep.subr.mxu0 %v258
    %317 = vmatpush1.msra.mxu0 %v257
    %318 = vmatprep.subr.mxu0 %v260
    %319 = vmatpush1.msra.mxu0 %v259
    %320 = vmatprep.subr.mxu0 %v262
    %321 = vmatpush1.msra.mxu0 %v261
    %322 = vmatprep.subr.mxu0 %v264
    %323 = vmatpush1.msra.mxu0 %v263
    %324 = vmatprep.subr.mxu0 0.0
    %325 = vmatpush1.msra.mxu0 0.0
    %326 = vmatprep.subr.mxu0 0.0
    %327 = vmatpush1.msra.mxu0 0.0
    %328 = vmatprep.subr.mxu0 0.0
    %329 = vmatpush1.msra.mxu0 0.0
    %330 = vmatprep.subr.mxu0 0.0
    %331 = vmatpush1.msra.mxu0 0.0
    %332 = vmatprep.subr.mxu0 0.0
    %333 = vmatpush1.msra.mxu0 0.0
    %334 = vmatprep.subr.mxu0 0.0
    %335 = vmatpush1.msra.mxu0 0.0
    %336 = vmatprep.subr.mxu0 0.0
    %337 = vmatpush1.msra.mxu0 0.0
    %338 = vmatprep.subr.mxu0 0.0
    %339 = vmatpush1.msra.mxu0 0.0
    %340 = vmatprep.subr.mxu0 0.0
    %341 = vmatpush1.msra.mxu0 0.0
    %342 = vmatprep.subr.mxu0 0.0
    %343 = vmatpush1.msra.mxu0 0.0
    %344 = vmatprep.subr.mxu0 0.0
    %345 = vmatpush1.msra.mxu0 0.0
    %346 = vmatprep.subr.mxu0 0.0
    %347 = vmatpush1.msra.mxu0 0.0
    %348 = vmatprep.mubr.f32.mxu0 %v279
    %349 = vmatmul.mubr.f32.gmra.mrb[0].mxu0 %v221
    %v350 = vpop.f32.mrb[0].mxu0
    %v351 = vadd.f32 %v270, %v350
    %v352 = vpop.f32.mrb[0].mxu0
    %v353 = vadd.f32 %v274, %v352
    %354 = vmatprep.mubr.f32.mxu0 %v282
    %355 = vmatmul.mubr.f32.gmra.mrb[0].mxu0 %v223
    %v356 = vpop.f32.mrb[0].mxu0
    %v357 = vadd.f32 %v270, %v356
    %v358 = vpop.f32.mrb[0].mxu0
    %v359 = vadd.f32 %v274, %v358
    %360 = vdwg.mxu0
    %v361 = vmax.f32 %v351, 0.0
    %v362 = vmax.f32 %v353, 0.0
    %v363 = vmax.f32 %v357, 0.0
    %v364 = vmax.f32 %v359, 0.0
    %v365 = vld [vmem:[%s6] sm:$0xff]
    %v366 = vld [vmem:[%s6 + $0x8] sm:$0xff]
    %v367 = vld [vmem:[%s6 + $0x10] sm:$0xff]
    %v368 = vld [vmem:[%s6 + $0x18] sm:$0xff]
    %v369 = vld [vmem:[%s6 + $0x20] sm:$0xff]
    %v370 = vld [vmem:[%s6 + $0x28] sm:$0xff]
    %v371 = vld [vmem:[%s6 + $0x30] sm:$0xff]
    %v372 = vld [vmem:[%s6 + $0x38] sm:$0xff]
    %v373 = vld [vmem:[%s6 + $0x40] sm:$0xff]
    %v374 = vld [vmem:[%s6 + $0x48] sm:$0xff]
    %v375 = vld [vmem:[%s6 + $0x50] sm:$0xff]
    %v376 = vld [vmem:[%s6 + $0x58] sm:$0xff]
    %v377 = vld [vmem:[%s6 + $0x60] sm:$0xff]
    %v378 = vld [vmem:[%s6 + $0x68] sm:$0xff]
    %v379 = vld [vmem:[%s6 + $0x70] sm:$0xff]
    %v380 = vld [vmem:[%s6 + $0x78] sm:$0xff]
    %v381 = vld [vmem:[%s6 + $0x80] sm:$0xff]
    %v382 = vld [vmem:[%s6 + $0x88] sm:$0xff]
    %v383 = vld [vmem:[%s6 + $0x90] sm:$0xff]
    %v384 = vld [vmem:[%s6 + $0x98] sm:$0xff]
    %v385 = vld [vmem:[%s6 + $0xa0] sm:$0xff]
    %v386 = vld [vmem:[%s6 + $0xa8] sm:$0xff]
    %v387 = vld [vmem:[%s6 + $0xb0] sm:$0xff]
    %v388 = vld [vmem:[%s6 + $0xb8] sm:$0xff]
    %v389 = vld [vmem:[%s6 + $0xc0] sm:$0xff]
    %v390 = vld [vmem:[#allocation12] sm:$0x1]
    %v392 = vlaneseq
    %v393 = vshrl.u32 %v392, 7
    %v394 = vsub.s32 0, %v393
    %v395 = vrot.slane %v390, %v394
    %vm397 = vcmask 588800
    %v399 = vsel %vm397, %v362, 0
    %v402 = vsel %vm397, %v364, 0
    %404 = vmatprep.subr.mxu0 0.0
    %405 = vmatpush1.msra.mxu0 %v365
    %406 = vmatprep.subr.mxu0 0.0
    %407 = vmatpush1.msra.mxu0 %v366
    %408 = vmatprep.subr.mxu0 0.0
    %409 = vmatpush1.msra.mxu0 %v367
    %410 = vmatprep.subr.mxu0 0.0
    %411 = vmatpush1.msra.mxu0 %v368
    %412 = vmatprep.subr.mxu0 0.0
    %413 = vmatpush1.msra.mxu0 %v369
    %414 = vmatprep.subr.mxu0 0.0
    %415 = vmatpush1.msra.mxu0 %v370
    %416 = vmatprep.subr.mxu0 0.0
    %417 = vmatpush1.msra.mxu0 %v371
    %418 = vmatprep.subr.mxu0 0.0
    %419 = vmatpush1.msra.mxu0 %v372
    %420 = vmatprep.subr.mxu0 0.0
    %421 = vmatpush1.msra.mxu0 %v373
    %422 = vmatprep.subr.mxu0 0.0
    %423 = vmatpush1.msra.mxu0 %v374
    %424 = vmatprep.subr.mxu0 0.0
    %425 = vmatpush1.msra.mxu0 %v375
    %426 = vmatprep.subr.mxu0 0.0
    %427 = vmatpush1.msra.mxu0 %v376
    %428 = vmatprep.subr.mxu0 0.0
    %429 = vmatpush1.msra.mxu0 %v377
    %430 = vmatprep.subr.mxu0 0.0
    %431 = vmatpush1.msra.mxu0 %v378
    %432 = vmatprep.subr.mxu0 0.0
    %433 = vmatpush1.msra.mxu0 %v379
    %434 = vmatprep.subr.mxu0 0.0
    %435 = vmatpush1.msra.mxu0 %v380
    %436 = vmatprep.subr.mxu0 0.0
    %437 = vmatpush1.msra.mxu0 %v381
    %438 = vmatprep.subr.mxu0 0.0
    %439 = vmatpush1.msra.mxu0 %v382
    %440 = vmatprep.subr.mxu0 0.0
    %441 = vmatpush1.msra.mxu0 %v383
    %442 = vmatprep.subr.mxu0 0.0
    %443 = vmatpush1.msra.mxu0 %v384
    %444 = vmatprep.subr.mxu0 0.0
    %445 = vmatpush1.msra.mxu0 %v385
    %446 = vmatprep.subr.mxu0 0.0
    %447 = vmatpush1.msra.mxu0 %v386
    %448 = vmatprep.subr.mxu0 0.0
    %449 = vmatpush1.msra.mxu0 %v387
    %450 = vmatprep.subr.mxu0 0.0
    %451 = vmatpush1.msra.mxu0 %v388
    %452 = vmatprep.subr.mxu0 0.0
    %453 = vmatpush1.msra.mxu0 %v389
    %454 = vmatprep.subr.mxu0 0.0
    %455 = vmatpush1.msra.mxu0 0.0
    %456 = vmatprep.subr.mxu0 0.0
    %457 = vmatpush1.msra.mxu0 0.0
    %458 = vmatprep.subr.mxu0 0.0
    %459 = vmatpush1.msra.mxu0 0.0
    %460 = vmatprep.subr.mxu0 0.0
    %461 = vmatpush1.msra.mxu0 0.0
    %462 = vmatprep.subr.mxu0 0.0
    %463 = vmatpush1.msra.mxu0 0.0
    %464 = vmatprep.subr.mxu0 0.0
    %465 = vmatpush1.msra.mxu0 0.0
    %466 = vmatprep.subr.mxu0 0.0
    %467 = vmatpush1.msra.mxu0 0.0
    %468 = vmatprep.mubr.f32.mxu0 %v399
    %469 = vmatmul.mubr.f32.gmra.mrb[0].mxu0 %v361
    %v470 = vpop.f32.mrb[0].mxu0
    %v471 = vadd.f32 %v395, %v470
    %v472 = vpop.f32.mrb[0].mxu0
    %473 = vmatprep.mubr.f32.mxu0 %v402
    %474 = vmatmul.mubr.f32.gmra.mrb[0].mxu0 %v363
    %v475 = vpop.f32.mrb[0].mxu0
    %v476 = vadd.f32 %v395, %v475
    %v477 = vpop.f32.mrb[0].mxu0
    %478 = vdwg.mxu0
    %v479 = vld [vmem:[#allocation4] sm:$0xff]
    %v480 = vld [vmem:[#allocation4 + $0x8] sm:$0xff]
    %v481 = vld [vmem:[#allocation9] sm:$0xff]
    %v482 = vld [vmem:[#allocation9 + $0x8] sm:$0xff]
    %v483 = vld [vmem:[#allocation9 + $0x10] sm:$0xff]
    %v484 = vld [vmem:[#allocation9 + $0x18] sm:$0xff]
    %v485 = vld [vmem:[#allocation9 + $0x20] sm:$0xff]
    %v486 = vld [vmem:[#allocation9 + $0x28] sm:$0xff]
    %v487 = vld [vmem:[#allocation9 + $0x30] sm:$0xff]
    %v488 = vld [vmem:[#allocation9 + $0x38] sm:$0xff]
    %v489 = vld [vmem:[#allocation9 + $0x40] sm:$0xff]
    %v490 = vld [vmem:[#allocation9 + $0x48] sm:$0xff]
    %v491 = vld [vmem:[#allocation9 + $0x50] sm:$0xff]
    %v492 = vld [vmem:[#allocation9 + $0x58] sm:$0xff]
    %v493 = vld [vmem:[#allocation9 + $0x60] sm:$0xff]
    %v494 = vld [vmem:[#allocation9 + $0x68] sm:$0xff]
    %v495 = vld [vmem:[#allocation9 + $0x70] sm:$0xff]
    %v496 = vld [vmem:[#allocation9 + $0x78] sm:$0xff]
    %v497 = vld [vmem:[#allocation9 + $0x80] sm:$0xff]
    %v498 = vld [vmem:[#allocation9 + $0x88] sm:$0xff]
    %v499 = vld [vmem:[#allocation9 + $0x90] sm:$0xff]
    %v500 = vld [vmem:[#allocation9 + $0x98] sm:$0xff]
    %v501 = vld [vmem:[#allocation9 + $0xa0] sm:$0xff]
    %v502 = vld [vmem:[#allocation9 + $0xa8] sm:$0xff]
    %v503 = vld [vmem:[#allocation9 + $0xb0] sm:$0xff]
    %v504 = vld [vmem:[#allocation9 + $0xb8] sm:$0xff]
    %v505 = vld [vmem:[#allocation10] sm:$0x3]
    %v507 = vlaneseq
    %v508 = vshrl.u32 %v507, 7
    %v509 = vsub.s32 0, %v508
    %v510 = vrot.slane %v505, %v509
    %v511 = vlaneseq
    %v512 = vshrl.u32 %v511, 7
    %v513 = vsub.s32 1, %v512
    %v514 = vrot.slane %v505, %v513
    %vm517 = vcmask 785408
    %v519 = vsel %vm517, %v479, 0
    %v522 = vsel %vm517, %v480, 0
    %524 = vmatprep.subr.mxu0 %v482
    %525 = vmatpush1.msra.mxu0 %v481
    %526 = vmatprep.subr.mxu0 %v484
    %527 = vmatpush1.msra.mxu0 %v483
    %528 = vmatprep.subr.mxu0 %v486
    %529 = vmatpush1.msra.mxu0 %v485
    %530 = vmatprep.subr.mxu0 %v488
    %531 = vmatpush1.msra.mxu0 %v487
    %532 = vmatprep.subr.mxu0 %v490
    %533 = vmatpush1.msra.mxu0 %v489
    %534 = vmatprep.subr.mxu0 %v492
    %535 = vmatpush1.msra.mxu0 %v491
    %536 = vmatprep.subr.mxu0 %v494
    %537 = vmatpush1.msra.mxu0 %v493
    %538 = vmatprep.subr.mxu0 %v496
    %539 = vmatpush1.msra.mxu0 %v495
    %540 = vmatprep.subr.mxu0 %v498
    %541 = vmatpush1.msra.mxu0 %v497
    %542 = vmatprep.subr.mxu0 %v500
    %543 = vmatpush1.msra.mxu0 %v499
    %544 = vmatprep.subr.mxu0 %v502
    %545 = vmatpush1.msra.mxu0 %v501
    %546 = vmatprep.subr.mxu0 %v504
    %547 = vmatpush1.msra.mxu0 %v503
    %548 = vmatprep.subr.mxu0 0.0
    %549 = vmatpush1.msra.mxu0 0.0
    %550 = vmatprep.subr.mxu0 0.0
    %551 = vmatpush1.msra.mxu0 0.0
    %552 = vmatprep.subr.mxu0 0.0
    %553 = vmatpush1.msra.mxu0 0.0
    %554 = vmatprep.subr.mxu0 0.0
    %555 = vmatpush1.msra.mxu0 0.0
    %556 = vmatprep.subr.mxu0 0.0
    %557 = vmatpush1.msra.mxu0 0.0
    %558 = vmatprep.subr.mxu0 0.0
    %559 = vmatpush1.msra.mxu0 0.0
    %560 = vmatprep.subr.mxu0 0.0
    %561 = vmatpush1.msra.mxu0 0.0
    %562 = vmatprep.subr.mxu0 0.0
    %563 = vmatpush1.msra.mxu0 0.0
    %564 = vmatprep.subr.mxu0 0.0
    %565 = vmatpush1.msra.mxu0 0.0
    %566 = vmatprep.subr.mxu0 0.0
    %567 = vmatpush1.msra.mxu0 0.0
    %568 = vmatprep.subr.mxu0 0.0
    %569 = vmatpush1.msra.mxu0 0.0
    %570 = vmatprep.subr.mxu0 0.0
    %571 = vmatpush1.msra.mxu0 0.0
    %572 = vmatprep.subr.mxu0 0.0
    %573 = vmatpush1.msra.mxu0 0.0
    %574 = vmatprep.subr.mxu0 0.0
    %575 = vmatpush1.msra.mxu0 0.0
    %576 = vmatprep.subr.mxu0 0.0
    %577 = vmatpush1.msra.mxu0 0.0
    %578 = vmatprep.subr.mxu0 0.0
    %579 = vmatpush1.msra.mxu0 0.0
    %580 = vmatprep.subr.mxu0 0.0
    %581 = vmatpush1.msra.mxu0 0.0
    %582 = vmatprep.subr.mxu0 0.0
    %583 = vmatpush1.msra.mxu0 0.0
    %584 = vmatprep.subr.mxu0 0.0
    %585 = vmatpush1.msra.mxu0 0.0
    %586 = vmatprep.subr.mxu0 0.0
    %587 = vmatpush1.msra.mxu0 0.0
    %588 = vmatprep.mubr.f32.mxu0 0.0
    %589 = vmatmul.mubr.f32.gmra.mrb[0].mxu0 %v519
    %v590 = vpop.f32.mrb[0].mxu0
    %v591 = vadd.f32 %v510, %v590
    %v592 = vpop.f32.mrb[0].mxu0
    %v593 = vadd.f32 %v514, %v592
    %594 = vmatprep.mubr.f32.mxu0 0.0
    %595 = vmatmul.mubr.f32.gmra.mrb[0].mxu0 %v522
    %v596 = vpop.f32.mrb[0].mxu0
    %v597 = vadd.f32 %v510, %v596
    %v598 = vpop.f32.mrb[0].mxu0
    %v599 = vadd.f32 %v514, %v598
    %600 = vdwg.mxu0
    %v601 = vmax.f32 %v591, 0.0
    %v602 = vmax.f32 %v593, 0.0
    %v603 = vmax.f32 %v597, 0.0
    %v604 = vmax.f32 %v599, 0.0
    %v606 = vsel %vm397, %v602, 0
    %v609 = vsel %vm397, %v604, 0
    %611 = vmatprep.subr.mxu0 0.0
    %612 = vmatpush1.msra.mxu0 %v365
    %613 = vmatprep.subr.mxu0 0.0
    %614 = vmatpush1.msra.mxu0 %v366
    %615 = vmatprep.subr.mxu0 0.0
    %616 = vmatpush1.msra.mxu0 %v367
    %617 = vmatprep.subr.mxu0 0.0
    %618 = vmatpush1.msra.mxu0 %v368
    %619 = vmatprep.subr.mxu0 0.0
    %620 = vmatpush1.msra.mxu0 %v369
    %621 = vmatprep.subr.mxu0 0.0
    %622 = vmatpush1.msra.mxu0 %v370
    %623 = vmatprep.subr.mxu0 0.0
    %624 = vmatpush1.msra.mxu0 %v371
    %625 = vmatprep.subr.mxu0 0.0
    %626 = vmatpush1.msra.mxu0 %v372
    %627 = vmatprep.subr.mxu0 0.0
    %628 = vmatpush1.msra.mxu0 %v373
    %629 = vmatprep.subr.mxu0 0.0
    %630 = vmatpush1.msra.mxu0 %v374
    %631 = vmatprep.subr.mxu0 0.0
    %632 = vmatpush1.msra.mxu0 %v375
    %633 = vmatprep.subr.mxu0 0.0
    %634 = vmatpush1.msra.mxu0 %v376
    %635 = vmatprep.subr.mxu0 0.0
    %636 = vmatpush1.msra.mxu0 %v377
    %637 = vmatprep.subr.mxu0 0.0
    %638 = vmatpush1.msra.mxu0 %v378
    %639 = vmatprep.subr.mxu0 0.0
    %640 = vmatpush1.msra.mxu0 %v379
    %641 = vmatprep.subr.mxu0 0.0
    %642 = vmatpush1.msra.mxu0 %v380
    %643 = vmatprep.subr.mxu0 0.0
    %644 = vmatpush1.msra.mxu0 %v381
    %645 = vmatprep.subr.mxu0 0.0
    %646 = vmatpush1.msra.mxu0 %v382
    %647 = vmatprep.subr.mxu0 0.0
    %648 = vmatpush1.msra.mxu0 %v383
    %649 = vmatprep.subr.mxu0 0.0
    %650 = vmatpush1.msra.mxu0 %v384
    %651 = vmatprep.subr.mxu0 0.0
    %652 = vmatpush1.msra.mxu0 %v385
    %653 = vmatprep.subr.mxu0 0.0
    %654 = vmatpush1.msra.mxu0 %v386
    %655 = vmatprep.subr.mxu0 0.0
    %656 = vmatpush1.msra.mxu0 %v387
    %657 = vmatprep.subr.mxu0 0.0
    %658 = vmatpush1.msra.mxu0 %v388
    %659 = vmatprep.subr.mxu0 0.0
    %660 = vmatpush1.msra.mxu0 %v389
    %661 = vmatprep.subr.mxu0 0.0
    %662 = vmatpush1.msra.mxu0 0.0
    %663 = vmatprep.subr.mxu0 0.0
    %664 = vmatpush1.msra.mxu0 0.0
    %665 = vmatprep.subr.mxu0 0.0
    %666 = vmatpush1.msra.mxu0 0.0
    %667 = vmatprep.subr.mxu0 0.0
    %668 = vmatpush1.msra.mxu0 0.0
    %669 = vmatprep.subr.mxu0 0.0
    %670 = vmatpush1.msra.mxu0 0.0
    %671 = vmatprep.subr.mxu0 0.0
    %672 = vmatpush1.msra.mxu0 0.0
    %673 = vmatprep.subr.mxu0 0.0
    %674 = vmatpush1.msra.mxu0 0.0
    %675 = vmatprep.mubr.f32.mxu0 %v606
    %676 = vmatmul.mubr.f32.gmra.mrb[0].mxu0 %v601
    %v677 = vpop.f32.mrb[0].mxu0
    %v678 = vadd.f32 %v395, %v677
    %v679 = vpop.f32.mrb[0].mxu0
    %680 = vmatprep.mubr.f32.mxu0 %v609
    %681 = vmatmul.mubr.f32.gmra.mrb[0].mxu0 %v603
    %v682 = vpop.f32.mrb[0].mxu0
    %v683 = vadd.f32 %v395, %v682
    %v684 = vpop.f32.mrb[0].mxu0
    %685 = vdwg.mxu0
    %v686 = vld [vmem:[#allocation13] sm:$0xff]
    %687 = vst.msk [vmem:[#allocation2] sm:$0xff] %vm277, %v686
    %v688 = vld [vmem:[#allocation15] sm:$0xff]
    %689 = vst.msk [vmem:[#allocation3] sm:$0xff] %vm277, %v688
    %690 = vst.msk [vmem:[#allocation2 + $0x8] sm:$0xff] %vm277, %v471
    %691 = vst.msk [vmem:[#allocation3 + $0x8] sm:$0xff] %vm277, %v476
    %692 = vst.msk [vmem:[#allocation2 + $0x10] sm:$0xff] %vm277, %v678
    %693 = vst.msk [vmem:[#allocation3 + $0x10] sm:$0xff] %vm277, %v683
    %v694 = vld [vmem:[%s8] sm:$0xff]
    %v695 = vld [vmem:[%s8 + $0x8] sm:$0xff]
    %v696 = vld [vmem:[%s8 + $0x10] sm:$0xff]
    %v697 = vld [vmem:[%s9] sm:$0xff]
    %v698 = vld [vmem:[%s9 + $0x8] sm:$0xff]
    %v699 = vld [vmem:[%s9 + $0x10] sm:$0xff]
    %v700 = vld [vmem:[#allocation2] sm:$0xff]
    %v701 = vld [vmem:[#allocation2 + $0x8] sm:$0xff]
    %v702 = vld [vmem:[#allocation2 + $0x10] sm:$0xff]
    %v703 = vld [vmem:[#allocation3] sm:$0xff]
    %v704 = vld [vmem:[#allocation3 + $0x8] sm:$0xff]
    %v705 = vld [vmem:[#allocation3 + $0x10] sm:$0xff]
    %v706 = vmul.f32 %v694, %v700
    %v707 = vmul.f32 %v695, %v701
    %v708 = vmul.f32 %v696, %v702
    %v709 = vmul.f32 %v697, %v703
    %v710 = vmul.f32 %v698, %v704
    %v711 = vmul.f32 %v699, %v705
    %v712 = vsub.f32 %v706, %v709
    %v713 = vsub.f32 %v707, %v710
    %v714 = vsub.f32 %v708, %v711
    %v715 = vmul.f32 %v697, %v700
    %v716 = vmul.f32 %v698, %v701
    %v717 = vmul.f32 %v699, %v702
    %v718 = vmul.f32 %v694, %v703
    %v719 = vmul.f32 %v695, %v704
    %v720 = vmul.f32 %v696, %v705
    %v721 = vadd.f32 %v715, %v718
    %v722 = vadd.f32 %v716, %v719
    %v723 = vadd.f32 %v717, %v720
    %v724 = vld [vmem:[%s18] sm:$0xff]
    %v725 = vld [vmem:[%s18 + $0x8] sm:$0xff]
    %v726 = vld [vmem:[%s18 + $0x10] sm:$0xff]
    %v727 = vld [vmem:[%s18 + $0x18] sm:$0xff]
    %v728 = vld [vmem:[%s19] sm:$0xff]
    %v729 = vld [vmem:[%s19 + $0x8] sm:$0xff]
    %v730 = vld [vmem:[%s19 + $0x10] sm:$0xff]
    %v731 = vld [vmem:[%s19 + $0x18] sm:$0xff]
    %v733 = vsel %vm277, %v721, 0
    %v736 = vsel %vm277, %v722, 0
    %v739 = vsel %vm277, %v723, 0
    %741 = vmatprep.subr.mxu0 0.0
    %742 = vmatpush1.msra.mxu0 %v728
    %743 = vmatprep.subr.mxu0 0.0
    %744 = vmatpush1.msra.mxu0 %v729
    %745 = vmatprep.subr.mxu0 0.0
    %746 = vmatpush1.msra.mxu0 %v730
    %747 = vmatprep.subr.mxu0 0.0
    %748 = vmatpush1.msra.mxu0 %v731
    %749 = vmatprep.subr.mxu0 0.0
    %750 = vmatpush1.msra.mxu0 0.0
    %751 = vmatprep.subr.mxu0 0.0
    %752 = vmatpush1.msra.mxu0 0.0
    %753 = vmatprep.subr.mxu0 0.0
    %754 = vmatpush1.msra.mxu0 0.0
    %755 = vmatprep.subr.mxu0 0.0
    %756 = vmatpush1.msra.mxu0 0.0
    %757 = vmatprep.subr.mxu0 0.0
    %758 = vmatpush1.msra.mxu0 0.0
    %759 = vmatprep.subr.mxu0 0.0
    %760 = vmatpush1.msra.mxu0 0.0
    %761 = vmatprep.subr.mxu0 0.0
    %762 = vmatpush1.msra.mxu0 0.0
    %763 = vmatprep.subr.mxu0 0.0
    %764 = vmatpush1.msra.mxu0 0.0
    %765 = vmatprep.subr.mxu0 0.0
    %766 = vmatpush1.msra.mxu0 0.0
    %767 = vmatprep.subr.mxu0 0.0
    %768 = vmatpush1.msra.mxu0 0.0
    %769 = vmatprep.subr.mxu0 0.0
    %770 = vmatpush1.msra.mxu0 0.0
    %771 = vmatprep.subr.mxu0 0.0
    %772 = vmatpush1.msra.mxu0 0.0
    %773 = vmatprep.subr.mxu0 0.0
    %774 = vmatpush1.msra.mxu0 0.0
    %775 = vmatprep.subr.mxu0 0.0
    %776 = vmatpush1.msra.mxu0 0.0
    %777 = vmatprep.subr.mxu0 0.0
    %778 = vmatpush1.msra.mxu0 0.0
    %779 = vmatprep.subr.mxu0 0.0
    %780 = vmatpush1.msra.mxu0 0.0
    %781 = vmatprep.subr.mxu0 0.0
    %782 = vmatpush1.msra.mxu0 0.0
    %783 = vmatprep.subr.mxu0 0.0
    %784 = vmatpush1.msra.mxu0 0.0
    %785 = vmatprep.subr.mxu0 0.0
    %786 = vmatpush1.msra.mxu0 0.0
    %787 = vmatprep.subr.mxu0 0.0
    %788 = vmatpush1.msra.mxu0 0.0
    %789 = vmatprep.subr.mxu0 0.0
    %790 = vmatpush1.msra.mxu0 0.0
    %791 = vmatprep.subr.mxu0 0.0
    %792 = vmatpush1.msra.mxu0 0.0
    %793 = vmatprep.subr.mxu0 0.0
    %794 = vmatpush1.msra.mxu0 0.0
    %795 = vmatprep.subr.mxu0 0.0
    %796 = vmatpush1.msra.mxu0 0.0
    %797 = vmatprep.subr.mxu0 0.0
    %798 = vmatpush1.msra.mxu0 0.0
    %799 = vmatprep.subr.mxu0 0.0
    %800 = vmatpush1.msra.mxu0 0.0
    %801 = vmatprep.subr.mxu0 0.0
    %802 = vmatpush1.msra.mxu0 0.0
    %803 = vmatprep.subr.mxu0 0.0
    %804 = vmatpush1.msra.mxu0 0.0
    %805 = vmatprep.mubr.f32.mxu0 0.0
    %806 = vmatmul.mubr.f32.gmra.mrb[0].mxu0 %v733
    %v807 = vpop.f32.mrb[0].mxu0
    %v808 = vadd.f32 0.0, %v807
    %v809 = vpop.f32.mrb[0].mxu0
    %810 = vmatprep.mubr.f32.mxu0 0.0
    %811 = vmatmul.mubr.f32.gmra.mrb[0].mxu0 %v736
    %v812 = vpop.f32.mrb[0].mxu0
    %v813 = vadd.f32 0.0, %v812
    %v814 = vpop.f32.mrb[0].mxu0
    %815 = vmatprep.mubr.f32.mxu0 0.0
    %816 = vmatmul.mubr.f32.gmra.mrb[0].mxu0 %v739
    %v817 = vpop.f32.mrb[0].mxu0
    %v818 = vadd.f32 0.0, %v817
    %v819 = vpop.f32.mrb[0].mxu0
    %820 = vdwg.mxu0
    %v822 = vsel %vm277, %v712, 0
    %v825 = vsel %vm277, %v713, 0
    %v828 = vsel %vm277, %v714, 0
    %830 = vmatprep.subr.mxu0 0.0
    %831 = vmatpush1.msra.mxu0 %v724
    %832 = vmatprep.subr.mxu0 0.0
    %833 = vmatpush1.msra.mxu0 %v725
    %834 = vmatprep.subr.mxu0 0.0
    %835 = vmatpush1.msra.mxu0 %v726
    %836 = vmatprep.subr.mxu0 0.0
    %837 = vmatpush1.msra.mxu0 %v727
    %838 = vmatprep.subr.mxu0 0.0
    %839 = vmatpush1.msra.mxu0 0.0
    %840 = vmatprep.subr.mxu0 0.0
    %841 = vmatpush1.msra.mxu0 0.0
    %842 = vmatprep.subr.mxu0 0.0
    %843 = vmatpush1.msra.mxu0 0.0
    %844 = vmatprep.subr.mxu0 0.0
    %845 = vmatpush1.msra.mxu0 0.0
    %846 = vmatprep.subr.mxu0 0.0
    %847 = vmatpush1.msra.mxu0 0.0
    %848 = vmatprep.subr.mxu0 0.0
    %849 = vmatpush1.msra.mxu0 0.0
    %850 = vmatprep.subr.mxu0 0.0
    %851 = vmatpush1.msra.mxu0 0.0
    %852 = vmatprep.subr.mxu0 0.0
    %853 = vmatpush1.msra.mxu0 0.0
    %854 = vmatprep.subr.mxu0 0.0
    %855 = vmatpush1.msra.mxu0 0.0
    %856 = vmatprep.subr.mxu0 0.0
    %857 = vmatpush1.msra.mxu0 0.0
    %858 = vmatprep.subr.mxu0 0.0
    %859 = vmatpush1.msra.mxu0 0.0
    %860 = vmatprep.subr.mxu0 0.0
    %861 = vmatpush1.msra.mxu0 0.0
    %862 = vmatprep.subr.mxu0 0.0
    %863 = vmatpush1.msra.mxu0 0.0
    %864 = vmatprep.subr.mxu0 0.0
    %865 = vmatpush1.msra.mxu0 0.0
    %866 = vmatprep.subr.mxu0 0.0
    %867 = vmatpush1.msra.mxu0 0.0
    %868 = vmatprep.subr.mxu0 0.0
    %869 = vmatpush1.msra.mxu0 0.0
    %870 = vmatprep.subr.mxu0 0.0
    %871 = vmatpush1.msra.mxu0 0.0
    %872 = vmatprep.subr.mxu0 0.0
    %873 = vmatpush1.msra.mxu0 0.0
    %874 = vmatprep.subr.mxu0 0.0
    %875 = vmatpush1.msra.mxu0 0.0
    %876 = vmatprep.subr.mxu0 0.0
    %877 = vmatpush1.msra.mxu0 0.0
    %878 = vmatprep.subr.mxu0 0.0
    %879 = vmatpush1.msra.mxu0 0.0
    %880 = vmatprep.subr.mxu0 0.0
    %881 = vmatpush1.msra.mxu0 0.0
    %882 = vmatprep.subr.mxu0 0.0
    %883 = vmatpush1.msra.mxu0 0.0
    %884 = vmatprep.subr.mxu0 0.0
    %885 = vmatpush1.msra.mxu0 0.0
    %886 = vmatprep.subr.mxu0 0.0
    %887 = vmatpush1.msra.mxu0 0.0
    %888 = vmatprep.subr.mxu0 0.0
    %889 = vmatpush1.msra.mxu0 0.0
    %890 = vmatprep.subr.mxu0 0.0
    %891 = vmatpush1.msra.mxu0 0.0
    %892 = vmatprep.subr.mxu0 0.0
    %893 = vmatpush1.msra.mxu0 0.0
    %894 = vmatprep.mubr.f32.mxu0 0.0
    %895 = vmatmul.mubr.f32.gmra.mrb[0].mxu0 %v822
    %v896 = vpop.f32.mrb[0].mxu0
    %v897 = vadd.f32 %v808, %v896
    %v898 = vpop.f32.mrb[0].mxu0
    %899 = vmatprep.mubr.f32.mxu0 0.0
    %900 = vmatmul.mubr.f32.gmra.mrb[0].mxu0 %v825
    %v901 = vpop.f32.mrb[0].mxu0
    %v902 = vadd.f32 %v813, %v901
    %v903 = vpop.f32.mrb[0].mxu0
    %904 = vmatprep.mubr.f32.mxu0 0.0
    %905 = vmatmul.mubr.f32.gmra.mrb[0].mxu0 %v828
    %v906 = vpop.f32.mrb[0].mxu0
    %v907 = vadd.f32 %v818, %v906
    %v908 = vpop.f32.mrb[0].mxu0
    %909 = vdwg.mxu0
    %vm910 = vcmask 130048
    %911 = vst.msk [vmem:[%s22] sm:$0xff] %vm910, %v897
    %912 = vst.msk [vmem:[%s22 + $0x8] sm:$0xff] %vm910, %v902
    %913 = vst.msk [vmem:[%s22 + $0x10] sm:$0xff] %vm910, %v907
    %v914 = vld [vmem:[#allocation18] sm:$0xff]
    %v915 = vld [vmem:[#allocation19] sm:$0xff]
    %v916 = vld [vmem:[#allocation21] sm:$0xff]
    %v917 = vld [vmem:[#allocation22] sm:$0xff]
    %v918 = vmul.f32 %v914, %v916
    %v919 = vmul.f32 %v915, %v917
    %v920 = vsub.f32 %v918, %v919
    %v921 = vmul.f32 %v915, %v916
    %v922 = vmul.f32 %v914, %v917
    %v923 = vadd.f32 %v921, %v922
    %v924 = vld [vmem:[%s20] sm:$0xff]
    %v925 = vld [vmem:[%s20 + $0x8] sm:$0xff]
    %v926 = vld [vmem:[%s20 + $0x10] sm:$0xff]
    %v927 = vld [vmem:[%s20 + $0x18] sm:$0xff]
    %v928 = vld [vmem:[%s21] sm:$0xff]
    %v929 = vld [vmem:[%s21 + $0x8] sm:$0xff]
    %v930 = vld [vmem:[%s21 + $0x10] sm:$0xff]
    %v931 = vld [vmem:[%s21 + $0x18] sm:$0xff]
    %v933 = vsel %vm277, %v923, 0
    %935 = vmatprep.subr.mxu0 0.0
    %936 = vmatpush1.msra.mxu0 %v928
    %937 = vmatprep.subr.mxu0 0.0
    %938 = vmatpush1.msra.mxu0 %v929
    %939 = vmatprep.subr.mxu0 0.0
    %940 = vmatpush1.msra.mxu0 %v930
    %941 = vmatprep.subr.mxu0 0.0
    %942 = vmatpush1.msra.mxu0 %v931
    %943 = vmatprep.subr.mxu0 0.0
    %944 = vmatpush1.msra.mxu0 0.0
    %945 = vmatprep.subr.mxu0 0.0
    %946 = vmatpush1.msra.mxu0 0.0
    %947 = vmatprep.subr.mxu0 0.0
    %948 = vmatpush1.msra.mxu0 0.0
    %949 = vmatprep.subr.mxu0 0.0
    %950 = vmatpush1.msra.mxu0 0.0
    %951 = vmatprep.subr.mxu0 0.0
    %952 = vmatpush1.msra.mxu0 0.0
    %953 = vmatprep.subr.mxu0 0.0
    %954 = vmatpush1.msra.mxu0 0.0
    %955 = vmatprep.subr.mxu0 0.0
    %956 = vmatpush1.msra.mxu0 0.0
    %957 = vmatprep.subr.mxu0 0.0
    %958 = vmatpush1.msra.mxu0 0.0
    %959 = vmatprep.subr.mxu0 0.0
    %960 = vmatpush1.msra.mxu0 0.0
    %961 = vmatprep.subr.mxu0 0.0
    %962 = vmatpush1.msra.mxu0 0.0
    %963 = vmatprep.subr.mxu0 0.0
    %964 = vmatpush1.msra.mxu0 0.0
    %965 = vmatprep.subr.mxu0 0.0
    %966 = vmatpush1.msra.mxu0 0.0
    %967 = vmatprep.subr.mxu0 0.0
    %968 = vmatpush1.msra.mxu0 0.0
    %969 = vmatprep.subr.mxu0 0.0
    %970 = vmatpush1.msra.mxu0 0.0
    %971 = vmatprep.subr.mxu0 0.0
    %972 = vmatpush1.msra.mxu0 0.0
    %973 = vmatprep.subr.mxu0 0.0
    %974 = vmatpush1.msra.mxu0 0.0
    %975 = vmatprep.subr.mxu0 0.0
    %976 = vmatpush1.msra.mxu0 0.0
    %977 = vmatprep.subr.mxu0 0.0
    %978 = vmatpush1.msra.mxu0 0.0
    %979 = vmatprep.subr.mxu0 0.0
    %980 = vmatpush1.msra.mxu0 0.0
    %981 = vmatprep.subr.mxu0 0.0
    %982 = vmatpush1.msra.mxu0 0.0
    %983 = vmatprep.subr.mxu0 0.0
    %984 = vmatpush1.msra.mxu0 0.0
    %985 = vmatprep.subr.mxu0 0.0
    %986 = vmatpush1.msra.mxu0 0.0
    %987 = vmatprep.subr.mxu0 0.0
    %988 = vmatpush1.msra.mxu0 0.0
    %989 = vmatprep.subr.mxu0 0.0
    %990 = vmatpush1.msra.mxu0 0.0
    %991 = vmatprep.subr.mxu0 0.0
    %992 = vmatpush1.msra.mxu0 0.0
    %993 = vmatprep.subr.mxu0 0.0
    %994 = vmatpush1.msra.mxu0 0.0
    %995 = vmatprep.subr.mxu0 0.0
    %996 = vmatpush1.msra.mxu0 0.0
    %997 = vmatprep.subr.mxu0 0.0
    %998 = vmatpush1.msra.mxu0 0.0
    %999 = vmatprep.mubr.f32.mxu0 0.0
    %1000 = vmatmul.mubr.f32.gmra.mrb[0].mxu0 %v933
    %v1001 = vpop.f32.mrb[0].mxu0
    %v1002 = vadd.f32 0.0, %v1001
    %v1003 = vpop.f32.mrb[0].mxu0
    %1004 = vdwg.mxu0
    %v1006 = vsel %vm277, %v920, 0
    %1008 = vmatprep.subr.mxu0 0.0
    %1009 = vmatpush1.msra.mxu0 %v924
    %1010 = vmatprep.subr.mxu0 0.0
    %1011 = vmatpush1.msra.mxu0 %v925
    %1012 = vmatprep.subr.mxu0 0.0
    %1013 = vmatpush1.msra.mxu0 %v926
    %1014 = vmatprep.subr.mxu0 0.0
    %1015 = vmatpush1.msra.mxu0 %v927
    %1016 = vmatprep.subr.mxu0 0.0
    %1017 = vmatpush1.msra.mxu0 0.0
    %1018 = vmatprep.subr.mxu0 0.0
    %1019 = vmatpush1.msra.mxu0 0.0
    %1020 = vmatprep.subr.mxu0 0.0
    %1021 = vmatpush1.msra.mxu0 0.0
    %1022 = vmatprep.subr.mxu0 0.0
    %1023 = vmatpush1.msra.mxu0 0.0
    %1024 = vmatprep.subr.mxu0 0.0
    %1025 = vmatpush1.msra.mxu0 0.0
    %1026 = vmatprep.subr.mxu0 0.0
    %1027 = vmatpush1.msra.mxu0 0.0
    %1028 = vmatprep.subr.mxu0 0.0
    %1029 = vmatpush1.msra.mxu0 0.0
    %1030 = vmatprep.subr.mxu0 0.0
    %1031 = vmatpush1.msra.mxu0 0.0
    %1032 = vmatprep.subr.mxu0 0.0
    %1033 = vmatpush1.msra.mxu0 0.0
    %1034 = vmatprep.subr.mxu0 0.0
    %1035 = vmatpush1.msra.mxu0 0.0
    %1036 = vmatprep.subr.mxu0 0.0
    %1037 = vmatpush1.msra.mxu0 0.0
    %1038 = vmatprep.subr.mxu0 0.0
    %1039 = vmatpush1.msra.mxu0 0.0
    %1040 = vmatprep.subr.mxu0 0.0
    %1041 = vmatpush1.msra.mxu0 0.0
    %1042 = vmatprep.subr.mxu0 0.0
    %1043 = vmatpush1.msra.mxu0 0.0
    %1044 = vmatprep.subr.mxu0 0.0
    %1045 = vmatpush1.msra.mxu0 0.0
    %1046 = vmatprep.subr.mxu0 0.0
    %1047 = vmatpush1.msra.mxu0 0.0
    %1048 = vmatprep.subr.mxu0 0.0
    %1049 = vmatpush1.msra.mxu0 0.0
    %1050 = vmatprep.subr.mxu0 0.0
    %1051 = vmatpush1.msra.mxu0 0.0
    %1052 = vmatprep.subr.mxu0 0.0
    %1053 = vmatpush1.msra.mxu0 0.0
    %1054 = vmatprep.subr.mxu0 0.0
    %1055 = vmatpush1.msra.mxu0 0.0
    %1056 = vmatprep.subr.mxu0 0.0
    %1057 = vmatpush1.msra.mxu0 0.0
    %1058 = vmatprep.subr.mxu0 0.0
    %1059 = vmatpush1.msra.mxu0 0.0
    %1060 = vmatprep.subr.mxu0 0.0
    %1061 = vmatpush1.msra.mxu0 0.0
    %1062 = vmatprep.subr.mxu0 0.0
    %1063 = vmatpush1.msra.mxu0 0.0
    %1064 = vmatprep.subr.mxu0 0.0
    %1065 = vmatpush1.msra.mxu0 0.0
    %1066 = vmatprep.subr.mxu0 0.0
    %1067 = vmatpush1.msra.mxu0 0.0
    %1068 = vmatprep.subr.mxu0 0.0
    %1069 = vmatpush1.msra.mxu0 0.0
    %1070 = vmatprep.subr.mxu0 0.0
    %1071 = vmatpush1.msra.mxu0 0.0
    %1072 = vmatprep.mubr.f32.mxu0 0.0
    %1073 = vmatmul.mubr.f32.gmra.mrb[0].mxu0 %v1006
    %v1074 = vpop.f32.mrb[0].mxu0
    %v1075 = vadd.f32 %v1002, %v1074
    %v1076 = vpop.f32.mrb[0].mxu0
    %1077 = vdwg.mxu0
    %1078 = vst.msk [vmem:[#allocation24] sm:$0xff] %vm910, %v1075
    %v1079 = vld [vmem:[%s12] sm:$0xff]
    %v1080 = vld [vmem:[%s12 + $0x8] sm:$0xff]
    %v1081 = vld [vmem:[%s12 + $0x10] sm:$0xff]
    %v1082 = vld [vmem:[#allocation16] sm:$0xff]
    %v1083 = vld [vmem:[#allocation16 + $0x8] sm:$0xff]
    %v1084 = vld [vmem:[#allocation16 + $0x10] sm:$0xff]
    %v1085 = vmul.f32 %v1079, %v1079
    %v1086 = vmul.f32 %v1080, %v1080
    %v1087 = vmul.f32 %v1081, %v1081
    %v1088 = vmul.f32 %v1082, %v1082
    %v1089 = vmul.f32 %v1083, %v1083
    %v1090 = vmul.f32 %v1084, %v1084
    %v1091 = vadd.f32 %v1085, %v1088
    %v1092 = vadd.f32 %v1086, %v1089
    %v1093 = vadd.f32 %v1087, %v1090
    %v1094 = vrsqrt.pop %v1091
    %v1095 = vmul.f32 %v1091, %v1094
    %vm1096 = vcmp.eq.f32.partialorder %v1091, inf
    %v1097 = vsel %vm1096, %v1091, %v1095
    %vm1098 = vcmp.eq.f32.partialorder %v1091, 0.0
    %v1099 = vand.u32 %v1091, 2147483648
    %v1100 = vsel %vm1098, %v1099, %v1097
    %v1101 = vrsqrt.pop %v1092
    %v1102 = vmul.f32 %v1092, %v1101
    %vm1103 = vcmp.eq.f32.partialorder %v1092, inf
    %v1104 = vsel %vm1103, %v1092, %v1102
    %vm1105 = vcmp.eq.f32.partialorder %v1092, 0.0
    %v1106 = vand.u32 %v1092, 2147483648
    %v1107 = vsel %vm1105, %v1106, %v1104
    %v1108 = vrsqrt.pop %v1093
    %v1109 = vmul.f32 %v1093, %v1108
    %vm1110 = vcmp.eq.f32.partialorder %v1093, inf
    %v1111 = vsel %vm1110, %v1093, %v1109
    %vm1112 = vcmp.eq.f32.partialorder %v1093, 0.0
    %v1113 = vand.u32 %v1093, 2147483648
    %v1114 = vsel %vm1112, %v1113, %v1111
    %1115 = vst.msk [vmem:[#allocation25] sm:$0xff] %vm277, %v1100
    %1116 = vst.msk [vmem:[#allocation25 + $0x8] sm:$0xff] %vm277, %v1107
    %1117 = vst.msk [vmem:[#allocation25 + $0x10] sm:$0xff] %vm277, %v1114
    // Predicated region
    $region138: #{tpu_custom_call.1} parent=1 // pred_check
      _
    $region139: #{tpu_custom_call.1} parent=1 // pred_check_branch
      %1119 = sbr.rel (0) target = $region141
    $region140: #{tpu_custom_call.1} parent=1 // pred_region
      _
    $region141: #{tpu_custom_call.1} parent=1 // pred_fallthru
      _
    // Predicated region
    $region142: #{tpu_custom_call.1} parent=1 // pred_check
      _
    $region143: #{tpu_custom_call.1} parent=1 // pred_check_branch
      %1121 = sbr.rel (0) target = $region145
    $region144: #{tpu_custom_call.1} parent=1 // pred_region
      %s1123 = ssub.s32 128, 128
      %1124 = vsyncadd [#allocation6], %s1123
      %s1126 = sshll.u32 [#allocation24], 4
      %s1127 = int_to_ptr.vmem [resolvable:$true] %s1126
      %1129 = dma.vmem_to_hbm [thread:$0]  %s1127, 128, %s23, [#allocation6]
    $region145: #{tpu_custom_call.1} parent=1 // pred_fallthru
      _
    // Predicated region
    $region146: #{tpu_custom_call.1} parent=1 // pred_check
      _
    $region147: #{tpu_custom_call.1} parent=1 // pred_check_branch
      %1131 = sbr.rel (0) target = $region149
    $region148: #{tpu_custom_call.1} parent=1 // pred_region
      %s1133 = ssub.s32 384, 384
      %1134 = vsyncadd [#allocation26], %s1133
      %s1135 = sshll.u32 [#allocation25], 4
      %s1136 = int_to_ptr.vmem [resolvable:$true] %s1135
      %1141 = dma.vmem_to_hbm [thread:$0]  %s1136, 384, %s24, [#allocation26], 128, 128, 8
    $region149: #{tpu_custom_call.1} parent=1 // pred_fallthru
      _
    // Predicated region
    $region150: #{tpu_custom_call.1} parent=1 // pred_check
      _
    $region151: #{tpu_custom_call.1} parent=1 // pred_check_branch
      %1143 = sbr.rel (0) target = $region153
    $region152: #{tpu_custom_call.1} parent=1 // pred_region
      _
    $region153: #{tpu_custom_call.1} parent=1 // pred_fallthru
      _
    // Predicated region
    $region154: #{tpu_custom_call.1} parent=1 // pred_check
      _
    $region155: #{tpu_custom_call.1} parent=1 // pred_check_branch
      %1145 = sbr.rel (0) target = $region157
    $region156: #{tpu_custom_call.1} parent=1 // pred_region
      %1146 = dma.done [#allocation6], 128
    $region157: #{tpu_custom_call.1} parent=1 // pred_fallthru
      _
    // Predicated region
    $region158: #{tpu_custom_call.1} parent=1 // pred_check
      _
    $region159: #{tpu_custom_call.1} parent=1 // pred_check_branch
      %1148 = sbr.rel (0) target = $region161
    $region160: #{tpu_custom_call.1} parent=1 // pred_region
      %1149 = dma.done [#allocation26], 384
    $region161: #{tpu_custom_call.1} parent=1 // pred_fallthru
      _
    %1150 = vsyncpa [#allocation5], 1
    %1151 = vsyncpa [#allocation8], 1
    %1152 = vsyncpa [#allocation11], 1
    %1153 = vsyncpa [#allocation14], 1
    %1154 = vsyncpa [#allocation17], 1
    %1155 = vsyncpa [#allocation20], 1
    %1156 = vsyncpa [#allocation23], 1
    %1157 = vsyncpa [#allocation6], 1
    %1158 = vsyncpa [#allocation26], 1

</llo_original>
